<compile_context>
chip_gen: v5e
topology: v5e:2x2
jax: 0.10.0
libtpu: 0.0.40
codegen_flags: <defaults>
</compile_context>

<pallas_src>
import functools

import jax
import jax.numpy as jnp
from jax import lax
from jax.experimental import pallas as pl
from jax.experimental.pallas import tpu as pltpu


def _round_up(x, m):
    return ((x + m - 1) // m) * m


def _cdiv(a, b):
    return -(-a // b)


# ----------------------------------------------------------------------------
# Pallas tiled linear (row x column grid, bf16 MXU operands, f32 accumulation)
# ----------------------------------------------------------------------------
def _linear_kernel(*refs, leaky, has_bias):
    if has_bias:
        x_ref, w_ref, b_ref, o_ref = refs
    else:
        x_ref, w_ref, o_ref = refs
        b_ref = None
    x = x_ref[...]
    if x.dtype != jnp.bfloat16:
        x = x.astype(jnp.bfloat16)          # cast in-kernel: no extra HBM pass
    y = jnp.dot(x, w_ref[...], preferred_element_type=jnp.float32)
    if has_bias:
        y = y + b_ref[...]
    if leaky:
        y = jnp.where(y > 0, y, 0.1 * y)    # LeakyReLU(0.1), f32 elementwise (v5e-safe)
    o_ref[...] = y.astype(o_ref.dtype)


def _pick_col_tile(dout, max_tn=1024):
    # Full Dout if small or not lane-aligned; otherwise the largest 128-multiple divisor.
    if dout <= max_tn or dout % 128 != 0:
        return dout
    nd = dout // 128
    for d in range(min(nd, max_tn // 128), 0, -1):
        if nd % d == 0:
            return 128 * d
    return dout


def linear_pallas(x, w, b=None, *, leaky=False, out_dtype=jnp.float32, x_col_block=0):
    """y = [leaky_relu](x_block @ w + b).

    x: [..., n_blocks*Din] (the Din-wide lane block `x_col_block` is consumed),
    w: [Din, Dout] (bf16 preferred, pre-packed), b: [Dout] or None.
    Rows are flattened to [M, *] and tiled; Dout is column-tiled in 128-multiples.
    """
    orig_shape = x.shape
    Din, Dout = w.shape
    x2 = x.reshape(-1, orig_shape[-1])
    M = x2.shape[0]
    x_bytes = jnp.dtype(x.dtype).itemsize
    out_bytes = jnp.dtype(out_dtype).itemsize

    tn = _pick_col_tile(Dout)

    # Even row split (padding at most a few sublanes), capped by a VMEM budget that is
    # conservative for v7x's 64 MiB physical VMEM (v5e/v6e have more headroom).
    TM_MAX = 1024
    n_row_tiles = max(1, _cdiv(M, TM_MAX))
    tm = _round_up(_cdiv(M, n_row_tiles), 8)

    def est(tm_):
        return (2 * tm_ * Din * x_bytes      # double-buffered input tile
                + 2 * Din * tn * 2           # double-buffered bf16 weight tile
                + 2 * tm_ * tn * out_bytes   # double-buffered output tile
                + 2 * tn * 4)                # bias
    VMEM_BUDGET = 40 << 20
    while tm > 8 and est(tm) > VMEM_BUDGET:
        tm = _round_up(tm // 2, 8)

    Mp = _round_up(M, tm)
    if Mp != M:
        x2 = jnp.pad(x2, ((0, Mp - M), (0, 0)))

    if w.dtype != jnp.bfloat16:
        w = w.astype(jnp.bfloat16)

    has_bias = b is not None
    args = [x2, w]
    in_specs = [
        pl.BlockSpec((tm, Din), lambda i, j, c=x_col_block: (i, c)),
        pl.BlockSpec((Din, tn), lambda i, j: (0, j)),
    ]
    if has_bias:
        args.append(b.reshape(1, Dout).astype(jnp.float32))
        in_specs.append(pl.BlockSpec((1, tn), lambda i, j: (0, j)))

    vmem_limit = int(min(max(est(tm) * 5 // 4, 32 << 20), 48 << 20))
    out = pl.pallas_call(
        functools.partial(_linear_kernel, leaky=leaky, has_bias=has_bias),
        out_shape=jax.ShapeDtypeStruct((Mp, Dout), out_dtype),
        grid=(Mp // tm, Dout // tn),
        in_specs=in_specs,
        out_specs=pl.BlockSpec((tm, tn), lambda i, j: (i, j)),
        compiler_params=pltpu.CompilerParams(
            dimension_semantics=("parallel", "parallel"),
            vmem_limit_bytes=vmem_limit),
    )(*args)

    if Mp != M:
        out = out[:M]
    return out.reshape(orig_shape[:-1] + (Dout,))


# ----------------------------------------------------------------------------
# Biaffine stage 2: per-batch (L,PAD) x (L*O,PAD)^T contraction, lane-dense output
# ----------------------------------------------------------------------------
def _biaffine_stage2_kernel(xl_ref, u_ref, o_ref):
    # xl_ref: (1, TL, PAD) bf16; u_ref: (1, L*O, PAD) bf16; o_ref: (1, TL, L*O) f32
    s = lax.dot_general(xl_ref[0], u_ref[0], (((1,), (1,)), ((), ())),
                        preferred_element_type=jnp.float32)
    o_ref[0] = s


def biaffine_stage2(z, u, *, col_block_l, n_out):
    """s[b,x,y,o] = sum_i xl[b,x,i] * u[b,y,o,i].

    z: [B, L, n_seg*PAD] fused MLP output (bf16); xl is the `col_block_l`-th PAD-wide
    lane block. u: [B, L*n_out, PAD] bf16 (stage-1 output). Returns [B, L, L, n_out] f32
    with no post-kernel permute (stores are lane-dense over L*n_out).
    """
    B, L, _ = z.shape
    PAD = u.shape[-1]
    LO = u.shape[1]

    # Optional query tiling (extra parallel axis, helps v7x megacore when B is 1/odd);
    # only used when an 8-multiple divisor of L exists so no boundary masking is needed.
    TL = L
    for cand in (256, 128, 64, 32, 16, 8):
        if L % cand == 0:
            TL = cand
            break

    out = pl.pallas_call(
        _biaffine_stage2_kernel,
        out_shape=jax.ShapeDtypeStruct((B, L, LO), jnp.float32),
        grid=(B, L // TL),
        in_specs=[
            pl.BlockSpec((1, TL, PAD), lambda b, q, c=col_block_l: (b, q, c)),
            pl.BlockSpec((1, LO, PAD), lambda b, q: (b, 0, 0)),
        ],
        out_specs=pl.BlockSpec((1, TL, LO), lambda b, q: (b, q, 0)),
        compiler_params=pltpu.CompilerParams(
            dimension_semantics=("parallel", "parallel")),
    )(z, u)
    return out.reshape(B, L, L, n_out)   # free metadata reshape (contiguous split)


# ----------------------------------------------------------------------------
# BiLSTM encoder (eval mode: VariationalLSTM == plain bidirectional LSTM), time-major
# ----------------------------------------------------------------------------
def _lstm_scan_tm(gx, w_hh_t, *, reverse, gate_off):
    # gx: [S, B, 8H] bf16 (fwd+bwd input projections, biases already added), time-major.
    # PyTorch gate order i, f, g, o. Backward direction: lax.scan(reverse=True) keeps
    # outputs in original time order (no explicit flips). Elementwise math stays f32.
    S, B, _ = gx.shape
    H = w_hh_t.shape[0]

    def step(carry, gx_t):
        h, c = carry
        g = gx_t[:, gate_off:gate_off + 4 * H].astype(jnp.float32) + jnp.dot(
            h.astype(jnp.bfloat16), w_hh_t, preferred_element_type=jnp.float32)
        i, f, gc, o = jnp.split(g, 4, axis=-1)
        i, f, o = jax.nn.sigmoid(i), jax.nn.sigmoid(f), jax.nn.sigmoid(o)
        gc = jnp.tanh(gc)
        c = f * c + i * gc
        h = o * jnp.tanh(c)
        return (h, c), h

    init = (jnp.zeros((B, H), jnp.float32), jnp.zeros((B, H), jnp.float32))
    _, hs = lax.scan(step, init, gx, reverse=reverse)
    return hs  # [S, B, H], original time order


def bilstm_encode_tm(x_tm, lstm_packed):
    # x_tm: [S, B, Din] time-major. One fused fwd+bwd input-projection GEMM per layer
    # (lane-dense [.., 8H], bf16 output halves the scan's HBM traffic).
    for (w_in, b_in, w_hh_f_t, w_hh_b_t) in lstm_packed:
        H = w_hh_f_t.shape[0]
        gx = linear_pallas(x_tm, w_in, b_in, out_dtype=jnp.bfloat16)   # [S, B, 8H]
        h_f = _lstm_scan_tm(gx, w_hh_f_t, reverse=False, gate_off=0)
        h_b = _lstm_scan_tm(gx, w_hh_b_t, reverse=True, gate_off=4 * H)
        x_tm = jnp.concatenate([h_f, h_b], axis=-1)
    return x_tm  # [S, B, 2H]


# ----------------------------------------------------------------------------
# One-time parameter packing (run OUTSIDE the jitted forward, at param-load time)
# ----------------------------------------------------------------------------
def pack_params(params):
    n_hidden, n_span = params["pos_l_w"].shape
    n_label = params["ne_l_w"].shape[1]
    PAD = _round_up(max(n_span, n_label) + 1, 128)

    # Fused MLP weight: 4 lane-aligned segments [W | bias-unit(=1) | zero-pad], PAD wide.
    heads = [
        (params["pos_l_w"], params["pos_l_b"], n_span),
        (params["pos_r_w"], params["pos_r_b"], n_span),
        (params["ne_l_w"], params["ne_l_b"], n_label),
        (params["ne_r_w"], params["ne_r_b"], n_label),
    ]
    w_fused = jnp.zeros((n_hidden, 4 * PAD), jnp.float32)
    b_fused = jnp.zeros((4 * PAD,), jnp.float32)
    for seg, (w_h, b_h, n_h) in enumerate(heads):
        off = seg * PAD
        w_fused = w_fused.at[:, off:off + n_h].set(w_h)
        b_fused = b_fused.at[off:off + n_h].set(b_h)
        b_fused = b_fused.at[off + n_h].set(1.0)   # bias unit: LeakyReLU(0*x + 1) == 1

    def pack_biaffine(w):
        # Stage-1 weight layout: Wt[j, o*PAD + i] = W[o, i, j] (zero-padded to PAD).
        O, p, _ = w.shape
        w_pad = jnp.pad(w, ((0, 0), (0, PAD - p), (0, PAD - p)))
        return jnp.transpose(w_pad, (2, 0, 1)).reshape(PAD, O * PAD).astype(jnp.bfloat16)

    lstm_packed = []
    din = params["word_embed"].shape[1]
    for (fw, bw) in params["lstm"]:
        w_ih_f, w_hh_f, b_ih_f, b_hh_f = fw
        w_ih_b, w_hh_b, b_ih_b, b_hh_b = bw
        w_in = jnp.concatenate([w_ih_f.T, w_ih_b.T], axis=1).astype(jnp.bfloat16)
        b_in = jnp.concatenate([b_ih_f + b_hh_f, b_ih_b + b_hh_b], axis=0)
        lstm_packed.append((w_in, b_in,
                            w_hh_f.T.astype(jnp.bfloat16),
                            w_hh_b.T.astype(jnp.bfloat16)))
        din = 2 * w_hh_f.shape[1]

    return {
        "word_embed": params["word_embed"],
        "lstm": tuple(lstm_packed),
        "mlp_w": w_fused.astype(jnp.bfloat16),
        "mlp_b": b_fused,
        "pos_w_t": pack_biaffine(params["pos_attn_w"]),
        "ne_w_t": pack_biaffine(params["ne_attn_w"]),
    }


# ----------------------------------------------------------------------------
# Full forward (jitted; consumes pre-packed params only)
# ----------------------------------------------------------------------------
def crf_constituency_forward(words, packed):
    # embed: feat=['char'] -> only the word embedding feeds the encoder (reference path).
    # Gather time-major directly; dropouts are identity in eval mode.
    embed_tm = jnp.take(packed["word_embed"], jnp.transpose(words), axis=0)  # [S, B, E]

    x_tm = bilstm_encode_tm(embed_tm, packed["lstm"])                        # [S, B, 2H]

    H = x_tm.shape[-1] // 2
    x_f, x_b = x_tm[..., :H], x_tm[..., H:]                                  # chunk(2,-1)
    fence_tm = jnp.concatenate([x_f[:-1], x_b[1:]], axis=-1)                 # [S-1, B, 2H]
    x = jnp.transpose(fence_tm, (1, 0, 2))                                   # [B, L, 2H]

    PAD = packed["mlp_w"].shape[1] // 4
    # One fused, lane-dense MLP launch for all four heads (bias column baked in).
    z = linear_pallas(x, packed["mlp_w"], packed["mlp_b"],
                      leaky=True, out_dtype=jnp.bfloat16)                    # [B, L, 4*PAD]

    B, L, _ = z.shape
    n_pos = packed["pos_w_t"].shape[1] // PAD
    n_ne = packed["ne_w_t"].shape[1] // PAD

    # Biaffine stage 1, batched over B*L rows: u[b,y,o*PAD+i] = sum_j xr[b,y,j] W[o,i,j].
    u_pos = linear_pallas(z, packed["pos_w_t"], None, x_col_block=1,
                          out_dtype=jnp.bfloat16)                            # [B, L, n_pos*PAD]
    u_ne = linear_pallas(z, packed["ne_w_t"], None, x_col_block=3,
                         out_dtype=jnp.bfloat16)                             # [B, L, n_ne*PAD]
    u_pos = u_pos.reshape(B, L * n_pos, PAD)   # free metadata reshapes
    u_ne = u_ne.reshape(B, L * n_ne, PAD)

    # Stage 2: scores emitted directly in [B, L, L, O] layout (no post-kernel permute).
    s_pos_span = biaffine_stage2(z, u_pos, col_block_l=0, n_out=n_pos)
    s_ne_label = biaffine_stage2(z, u_ne, col_block_l=2, n_out=n_ne)
    return s_pos_span, s_ne_label


# ----------------------------------------------------------------------------
# Deterministic parameter construction (mimics the PyTorch module's parameters)
# ----------------------------------------------------------------------------
def make_params(key, *, n_words, n_embed, n_lstm_hidden, n_lstm_layers,
                n_span_mlp, n_label_mlp, n_pos_labels, n_ne_labels):
    keys = iter(jax.random.split(key, 64))

    def rnd(shape, scale=0.1):
        return scale * jax.random.normal(next(keys), shape, jnp.float32)

    params = {"word_embed": rnd((n_words, n_embed), 1.0)}

    lstm = []
    din = n_embed
    for _ in range(n_lstm_layers):
        layer = []
        for _dir in range(2):
            w_ih = rnd((4 * n_lstm_hidden, din))
            w_hh = rnd((4 * n_lstm_hidden, n_lstm_hidden))
            b_ih = rnd((4 * n_lstm_hidden,))
            b_hh = rnd((4 * n_lstm_hidden,))
            layer.append((w_ih, w_hh, b_ih, b_hh))
        lstm.append(tuple(layer))
        din = 2 * n_lstm_hidden
    params["lstm"] = lstm

    n_hidden = 2 * n_lstm_hidden
    params["pos_l_w"] = rnd((n_hidden, n_span_mlp))
    params["pos_l_b"] = rnd((n_span_mlp,))
    params["pos_r_w"] = rnd((n_hidden, n_span_mlp))
    params["pos_r_b"] = rnd((n_span_mlp,))
    params["ne_l_w"] = rnd((n_hidden, n_label_mlp))
    params["ne_l_b"] = rnd((n_label_mlp,))
    params["ne_r_w"] = rnd((n_hidden, n_label_mlp))
    params["ne_r_b"] = rnd((n_label_mlp,))
    # Biaffine weights: [n_out, n_in + 1, n_in + 1] (bias_x=True, bias_y=True)
    params["pos_attn_w"] = rnd((n_pos_labels, n_span_mlp + 1, n_span_mlp + 1))
    params["ne_attn_w"] = rnd((n_ne_labels, n_label_mlp + 1, n_label_mlp + 1))
    return params


if __name__ == "__main__":
    B, S = 2, 8
    n_words = 50
    n_embed = 16
    n_lstm_hidden = 32
    n_lstm_layers = 2
    n_span_mlp = 48
    n_label_mlp = 16
    n_pos_labels = 5
    n_ne_labels = 3

    key = jax.random.PRNGKey(0)
    k_w, k_p = jax.random.split(key)
    # full-length sequences (no padding) -> pack/pad_packed_sequence are identities
    words = jax.random.randint(k_w, (B, S), 1, n_words, dtype=jnp.int32)

    params = make_params(
        k_p, n_words=n_words, n_embed=n_embed, n_lstm_hidden=n_lstm_hidden,
        n_lstm_layers=n_lstm_layers, n_span_mlp=n_span_mlp, n_label_mlp=n_label_mlp,
        n_pos_labels=n_pos_labels, n_ne_labels=n_ne_labels)

    # One-time packing at param-load time (outside the jitted forward).
    packed = jax.tree_util.tree_map(lambda a: a, pack_params(params))

    fwd = jax.jit(crf_constituency_forward)
    s_pos_span, s_ne_label = fwd(words, packed)
    jax.block_until_ready((s_pos_span, s_ne_label))

    assert s_pos_span.shape == (B, S - 1, S - 1, n_pos_labels), s_pos_span.shape
    assert s_ne_label.shape == (B, S - 1, S - 1, n_ne_labels), s_ne_label.shape
    assert bool(jnp.all(jnp.isfinite(s_pos_span))) and bool(jnp.all(jnp.isfinite(s_ne_label)))
    print("KERNEL_OK")
</pallas_src>

<mosaic_0001>
module attributes {stable_mosaic.version = 11 : i64} {
  func.func @_linear_kernel(%arg0: i32, %arg1: i32, %arg2: memref<16x16xf32, #tpu.memory_space<vmem>>, %arg3: memref<16x256xbf16, #tpu.memory_space<vmem>>, %arg4: memref<1x256xf32, #tpu.memory_space<vmem>>, %arg5: memref<16x256xbf16, #tpu.memory_space<vmem>>) attributes {dimension_semantics = [#tpu.dimension_semantics<parallel>, #tpu.dimension_semantics<parallel>], iteration_bounds = array<i64: 1, 1>, scalar_prefetch = 0 : i64, scratch_operands = 0 : i64, tpu.core_type = #tpu.core_type<tc>, window_params = [{transform_indices = @transform_0, window_bounds = array<i64: 16, 16>}, {transform_indices = @transform_1, window_bounds = array<i64: 16, 256>}, {transform_indices = @transform_2, window_bounds = array<i64: 1, 256>}, {transform_indices = @transform_3, window_bounds = array<i64: 16, 256>}]} {
    %c0 = arith.constant 0 : index
    %c0_0 = arith.constant 0 : index
    %0 = vector.load %arg2[%c0, %c0_0] : memref<16x16xf32, #tpu.memory_space<vmem>>, vector<16x16xf32>
    %1 = arith.truncf %0 : vector<16x16xf32> to vector<16x16xbf16>
    %c0_1 = arith.constant 0 : index
    %c0_2 = arith.constant 0 : index
    %2 = vector.load %arg3[%c0_1, %c0_2] : memref<16x256xbf16, #tpu.memory_space<vmem>>, vector<16x256xbf16>
    %cst = arith.constant dense<0.000000e+00> : vector<16x256xf32>
    %3 = tpu.matmul %1, %2, %cst {dimension_numbers = #tpu.dot_dimension_numbers<[1], [0], [0], [1], [0, 0, 1, 1], [], []>} : vector<16x16xbf16>, vector<16x256xbf16>, vector<16x256xf32> -> vector<16x256xf32>
    %c0_3 = arith.constant 0 : index
    %c0_4 = arith.constant 0 : index
    %4 = vector.load %arg4[%c0_3, %c0_4] : memref<1x256xf32, #tpu.memory_space<vmem>>, vector<1x256xf32>
    %5 = vector.broadcast %4 : vector<1x256xf32> to vector<16x256xf32>
    %6 = arith.addf %3, %5 : vector<16x256xf32>
    %7 = arith.truncf %6 : vector<16x256xf32> to vector<16x256xbf16>
    %c0_5 = arith.constant 0 : index
    %c0_6 = arith.constant 0 : index
    %8 = vector.load %arg5[%c0_5, %c0_6] : memref<16x256xbf16, #tpu.memory_space<vmem>>, vector<16x256xbf16>
    tpu.vector_store %arg5[%c0_5, %c0_6], %7 {strides = array<i32>} : memref<16x256xbf16, #tpu.memory_space<vmem>>, vector<16x256xbf16>,
    return
  }
  func.func @transform_0(%arg0: i32, %arg1: i32) -> (i32, i32) {
    %c0_i32 = arith.constant 0 : i32
    %c0_i32_0 = arith.constant 0 : i32
    return %arg0, %c0_i32 : i32, i32
  }
  func.func @transform_1(%arg0: i32, %arg1: i32) -> (i32, i32) {
    %c0_i32 = arith.constant 0 : i32
    %c0_i32_0 = arith.constant 0 : i32
    return %c0_i32, %arg1 : i32, i32
  }
  func.func @transform_2(%arg0: i32, %arg1: i32) -> (i32, i32) {
    %c0_i32 = arith.constant 0 : i32
    %c0_i32_0 = arith.constant 0 : i32
    return %c0_i32, %arg1 : i32, i32
  }
  func.func @transform_3(%arg0: i32, %arg1: i32) -> (i32, i32) {
    %c0_i32 = arith.constant 0 : i32
    return %arg0, %arg1 : i32, i32
  }
}

module attributes {stable_mosaic.version = 11 : i64} {
  func.func @_linear_kernel(%arg0: i32, %arg1: i32, %arg2: memref<16x64xf32, #tpu.memory_space<vmem>>, %arg3: memref<64x256xbf16, #tpu.memory_space<vmem>>, %arg4: memref<1x256xf32, #tpu.memory_space<vmem>>, %arg5: memref<16x256xbf16, #tpu.memory_space<vmem>>) attributes {dimension_semantics = [#tpu.dimension_semantics<parallel>, #tpu.dimension_semantics<parallel>], iteration_bounds = array<i64: 1, 1>, scalar_prefetch = 0 : i64, scratch_operands = 0 : i64, tpu.core_type = #tpu.core_type<tc>, window_params = [{transform_indices = @transform_0, window_bounds = array<i64: 16, 64>}, {transform_indices = @transform_1, window_bounds = array<i64: 64, 256>}, {transform_indices = @transform_2, window_bounds = array<i64: 1, 256>}, {transform_indices = @transform_3, window_bounds = array<i64: 16, 256>}]} {
    %c0 = arith.constant 0 : index
    %c0_0 = arith.constant 0 : index
    %0 = vector.load %arg2[%c0, %c0_0] : memref<16x64xf32, #tpu.memory_space<vmem>>, vector<16x64xf32>
    %1 = arith.truncf %0 : vector<16x64xf32> to vector<16x64xbf16>
    %c0_1 = arith.constant 0 : index
    %c0_2 = arith.constant 0 : index
    %2 = vector.load %arg3[%c0_1, %c0_2] : memref<64x256xbf16, #tpu.memory_space<vmem>>, vector<64x256xbf16>
    %cst = arith.constant dense<0.000000e+00> : vector<16x256xf32>
    %3 = tpu.matmul %1, %2, %cst {dimension_numbers = #tpu.dot_dimension_numbers<[1], [0], [0], [1], [0, 0, 1, 1], [], []>} : vector<16x64xbf16>, vector<64x256xbf16>, vector<16x256xf32> -> vector<16x256xf32>
    %c0_3 = arith.constant 0 : index
    %c0_4 = arith.constant 0 : index
    %4 = vector.load %arg4[%c0_3, %c0_4] : memref<1x256xf32, #tpu.memory_space<vmem>>, vector<1x256xf32>
    %5 = vector.broadcast %4 : vector<1x256xf32> to vector<16x256xf32>
    %6 = arith.addf %3, %5 : vector<16x256xf32>
    %7 = arith.truncf %6 : vector<16x256xf32> to vector<16x256xbf16>
    %c0_5 = arith.constant 0 : index
    %c0_6 = arith.constant 0 : index
    %8 = vector.load %arg5[%c0_5, %c0_6] : memref<16x256xbf16, #tpu.memory_space<vmem>>, vector<16x256xbf16>
    tpu.vector_store %arg5[%c0_5, %c0_6], %7 {strides = array<i32>} : memref<16x256xbf16, #tpu.memory_space<vmem>>, vector<16x256xbf16>,
    return
  }
  func.func @transform_0(%arg0: i32, %arg1: i32) -> (i32, i32) {
    %c0_i32 = arith.constant 0 : i32
    %c0_i32_0 = arith.constant 0 : i32
    return %arg0, %c0_i32 : i32, i32
  }
  func.func @transform_1(%arg0: i32, %arg1: i32) -> (i32, i32) {
    %c0_i32 = arith.constant 0 : i32
    %c0_i32_0 = arith.constant 0 : i32
    return %c0_i32, %arg1 : i32, i32
  }
  func.func @transform_2(%arg0: i32, %arg1: i32) -> (i32, i32) {
    %c0_i32 = arith.constant 0 : i32
    %c0_i32_0 = arith.constant 0 : i32
    return %c0_i32, %arg1 : i32, i32
  }
  func.func @transform_3(%arg0: i32, %arg1: i32) -> (i32, i32) {
    %c0_i32 = arith.constant 0 : i32
    return %arg0, %arg1 : i32, i32
  }
}

module attributes {stable_mosaic.version = 11 : i64} {
  func.func @_linear_kernel(%arg0: i32, %arg1: i32, %arg2: memref<16x128xbf16, #tpu.memory_space<vmem>>, %arg3: memref<128x384xbf16, #tpu.memory_space<vmem>>, %arg4: memref<16x384xbf16, #tpu.memory_space<vmem>>) attributes {dimension_semantics = [#tpu.dimension_semantics<parallel>, #tpu.dimension_semantics<parallel>], iteration_bounds = array<i64: 1, 1>, scalar_prefetch = 0 : i64, scratch_operands = 0 : i64, tpu.core_type = #tpu.core_type<tc>, window_params = [{transform_indices = @transform_0, window_bounds = array<i64: 16, 128>}, {transform_indices = @transform_1, window_bounds = array<i64: 128, 384>}, {transform_indices = @transform_2, window_bounds = array<i64: 16, 384>}]} {
    %c0 = arith.constant 0 : index
    %c0_0 = arith.constant 0 : index
    %0 = vector.load %arg2[%c0, %c0_0] : memref<16x128xbf16, #tpu.memory_space<vmem>>, vector<16x128xbf16>
    %c0_1 = arith.constant 0 : index
    %c0_2 = arith.constant 0 : index
    %1 = vector.load %arg3[%c0_1, %c0_2] : memref<128x384xbf16, #tpu.memory_space<vmem>>, vector<128x384xbf16>
    %cst = arith.constant dense<0.000000e+00> : vector<16x384xf32>
    %2 = tpu.matmul %0, %1, %cst {dimension_numbers = #tpu.dot_dimension_numbers<[1], [0], [0], [1], [0, 0, 1, 1], [], []>} : vector<16x128xbf16>, vector<128x384xbf16>, vector<16x384xf32> -> vector<16x384xf32>
    %3 = arith.truncf %2 : vector<16x384xf32> to vector<16x384xbf16>
    %c0_3 = arith.constant 0 : index
    %c0_4 = arith.constant 0 : index
    %4 = vector.load %arg4[%c0_3, %c0_4] : memref<16x384xbf16, #tpu.memory_space<vmem>>, vector<16x384xbf16>
    tpu.vector_store %arg4[%c0_3, %c0_4], %3 {strides = array<i32>} : memref<16x384xbf16, #tpu.memory_space<vmem>>, vector<16x384xbf16>,
    return
  }
  func.func @transform_0(%arg0: i32, %arg1: i32) -> (i32, i32) {
    %c3_i32 = arith.constant 3 : i32
    %c0_i32 = arith.constant 0 : i32
    return %arg0, %c3_i32 : i32, i32
  }
  func.func @transform_1(%arg0: i32, %arg1: i32) -> (i32, i32) {
    %c0_i32 = arith.constant 0 : i32
    %c0_i32_0 = arith.constant 0 : i32
    return %c0_i32, %arg1 : i32, i32
  }
  func.func @transform_2(%arg0: i32, %arg1: i32) -> (i32, i32) {
    %c0_i32 = arith.constant 0 : i32
    return %arg0, %arg1 : i32, i32
  }
}

module attributes {stable_mosaic.version = 11 : i64} {
  func.func @_linear_kernel(%arg0: i32, %arg1: i32, %arg2: memref<16x64xf32, #tpu.memory_space<vmem>>, %arg3: memref<64x512xbf16, #tpu.memory_space<vmem>>, %arg4: memref<1x512xf32, #tpu.memory_space<vmem>>, %arg5: memref<16x512xbf16, #tpu.memory_space<vmem>>) attributes {dimension_semantics = [#tpu.dimension_semantics<parallel>, #tpu.dimension_semantics<parallel>], iteration_bounds = array<i64: 1, 1>, scalar_prefetch = 0 : i64, scratch_operands = 0 : i64, tpu.core_type = #tpu.core_type<tc>, window_params = [{transform_indices = @transform_0, window_bounds = array<i64: 16, 64>}, {transform_indices = @transform_1, window_bounds = array<i64: 64, 512>}, {transform_indices = @transform_2, window_bounds = array<i64: 1, 512>}, {transform_indices = @transform_3, window_bounds = array<i64: 16, 512>}]} {
    %c0 = arith.constant 0 : index
    %c0_0 = arith.constant 0 : index
    %0 = vector.load %arg2[%c0, %c0_0] : memref<16x64xf32, #tpu.memory_space<vmem>>, vector<16x64xf32>
    %1 = arith.truncf %0 : vector<16x64xf32> to vector<16x64xbf16>
    %c0_1 = arith.constant 0 : index
    %c0_2 = arith.constant 0 : index
    %2 = vector.load %arg3[%c0_1, %c0_2] : memref<64x512xbf16, #tpu.memory_space<vmem>>, vector<64x512xbf16>
    %cst = arith.constant dense<0.000000e+00> : vector<16x512xf32>
    %3 = tpu.matmul %1, %2, %cst {dimension_numbers = #tpu.dot_dimension_numbers<[1], [0], [0], [1], [0, 0, 1, 1], [], []>} : vector<16x64xbf16>, vector<64x512xbf16>, vector<16x512xf32> -> vector<16x512xf32>
    %c0_3 = arith.constant 0 : index
    %c0_4 = arith.constant 0 : index
    %4 = vector.load %arg4[%c0_3, %c0_4] : memref<1x512xf32, #tpu.memory_space<vmem>>, vector<1x512xf32>
    %5 = vector.broadcast %4 : vector<1x512xf32> to vector<16x512xf32>
    %6 = arith.addf %3, %5 : vector<16x512xf32>
    %cst_5 = arith.constant 0.000000e+00 : f32
    %7 = vector.broadcast %cst_5 : f32 to vector<16x512xf32>
    %8 = arith.cmpf ogt, %6, %7 : vector<16x512xf32>
    %cst_6 = arith.constant 1.000000e-01 : f32
    %9 = vector.broadcast %cst_6 : f32 to vector<16x512xf32>
    %10 = arith.mulf %9, %6 : vector<16x512xf32>
    %11 = arith.select %8, %6, %10 : vector<16x512xi1>, vector<16x512xf32>
    %12 = arith.truncf %11 : vector<16x512xf32> to vector<16x512xbf16>
    %c0_7 = arith.constant 0 : index
    %c0_8 = arith.constant 0 : index
    %13 = vector.load %arg5[%c0_7, %c0_8] : memref<16x512xbf16, #tpu.memory_space<vmem>>, vector<16x512xbf16>
    tpu.vector_store %arg5[%c0_7, %c0_8], %12 {strides = array<i32>} : memref<16x512xbf16, #tpu.memory_space<vmem>>, vector<16x512xbf16>,
    return
  }
  func.func @transform_0(%arg0: i32, %arg1: i32) -> (i32, i32) {
    %c0_i32 = arith.constant 0 : i32
    %c0_i32_0 = arith.constant 0 : i32
    return %arg0, %c0_i32 : i32, i32
  }
  func.func @transform_1(%arg0: i32, %arg1: i32) -> (i32, i32) {
    %c0_i32 = arith.constant 0 : i32
    %c0_i32_0 = arith.constant 0 : i32
    return %c0_i32, %arg1 : i32, i32
  }
  func.func @transform_2(%arg0: i32, %arg1: i32) -> (i32, i32) {
    %c0_i32 = arith.constant 0 : i32
    %c0_i32_0 = arith.constant 0 : i32
    return %c0_i32, %arg1 : i32, i32
  }
  func.func @transform_3(%arg0: i32, %arg1: i32) -> (i32, i32) {
    %c0_i32 = arith.constant 0 : i32
    return %arg0, %arg1 : i32, i32
  }
}

module attributes {stable_mosaic.version = 11 : i64} {
  func.func @_biaffine_stage2_kernel(%arg0: i32, %arg1: i32, %arg2: memref<1x7x128xbf16, #tpu.memory_space<vmem>>, %arg3: memref<1x21x128xbf16, #tpu.memory_space<vmem>>, %arg4: memref<1x7x21xf32, #tpu.memory_space<vmem>>) attributes {dimension_semantics = [#tpu.dimension_semantics<parallel>, #tpu.dimension_semantics<parallel>], iteration_bounds = array<i64: 2, 1>, scalar_prefetch = 0 : i64, scratch_operands = 0 : i64, tpu.core_type = #tpu.core_type<tc>, window_params = [{transform_indices = @transform_0, window_bounds = array<i64: 1, 7, 128>}, {transform_indices = @transform_1, window_bounds = array<i64: 1, 21, 128>}, {transform_indices = @transform_2, window_bounds = array<i64: 1, 7, 21>}]} {
    %c0 = arith.constant 0 : index
    %c0_0 = arith.constant 0 : index
    %c0_1 = arith.constant 0 : index
    %0 = vector.load %arg2[%c0, %c0_0, %c0_1] : memref<1x7x128xbf16, #tpu.memory_space<vmem>>, vector<1x7x128xbf16>
    %1 = vector.shape_cast %0 : vector<1x7x128xbf16> to vector<7x128xbf16>
    %c0_2 = arith.constant 0 : index
    %c0_3 = arith.constant 0 : index
    %c0_4 = arith.constant 0 : index
    %2 = vector.load %arg3[%c0_2, %c0_3, %c0_4] : memref<1x21x128xbf16, #tpu.memory_space<vmem>>, vector<1x21x128xbf16>
    %3 = vector.shape_cast %2 : vector<1x21x128xbf16> to vector<21x128xbf16>
    %cst = arith.constant dense<0.000000e+00> : vector<7x21xf32>
    %4 = tpu.matmul %1, %3, %cst {dimension_numbers = #tpu.dot_dimension_numbers<[1], [1], [0], [0], [0, 0, 1, 0], [], []>} : vector<7x128xbf16>, vector<21x128xbf16>, vector<7x21xf32> -> vector<7x21xf32>
    %c0_5 = arith.constant 0 : index
    %c0_6 = arith.constant 0 : index
    %c0_7 = arith.constant 0 : index
    %5 = vector.load %arg4[%c0_5, %c0_6, %c0_7] : memref<1x7x21xf32, #tpu.memory_space<vmem>>, vector<1x7x21xf32>
    %6 = vector.shape_cast %5 : vector<1x7x21xf32> to vector<7x21xf32>
    %7 = vector.shape_cast %4 : vector<7x21xf32> to vector<1x7x21xf32>
    tpu.vector_store %arg4[%c0_5, %c0_6, %c0_7], %7 {strides = array<i32>} : memref<1x7x21xf32, #tpu.memory_space<vmem>>, vector<1x7x21xf32>,
    return
  }
  func.func @transform_0(%arg0: i32, %arg1: i32) -> (i32, i32, i32) {
    %c2_i32 = arith.constant 2 : i32
    %c0_i32 = arith.constant 0 : i32
    return %arg0, %arg1, %c2_i32 : i32, i32, i32
  }
  func.func @transform_1(%arg0: i32, %arg1: i32) -> (i32, i32, i32) {
    %c0_i32 = arith.constant 0 : i32
    %c0_i32_0 = arith.constant 0 : i32
    %c0_i32_1 = arith.constant 0 : i32
    return %arg0, %c0_i32, %c0_i32_0 : i32, i32, i32
  }
  func.func @transform_2(%arg0: i32, %arg1: i32) -> (i32, i32, i32) {
    %c0_i32 = arith.constant 0 : i32
    %c0_i32_0 = arith.constant 0 : i32
    return %arg0, %arg1, %c0_i32 : i32, i32, i32
  }
}

module attributes {stable_mosaic.version = 11 : i64} {
  func.func @_linear_kernel(%arg0: i32, %arg1: i32, %arg2: memref<16x128xbf16, #tpu.memory_space<vmem>>, %arg3: memref<128x640xbf16, #tpu.memory_space<vmem>>, %arg4: memref<16x640xbf16, #tpu.memory_space<vmem>>) attributes {dimension_semantics = [#tpu.dimension_semantics<parallel>, #tpu.dimension_semantics<parallel>], iteration_bounds = array<i64: 1, 1>, scalar_prefetch = 0 : i64, scratch_operands = 0 : i64, tpu.core_type = #tpu.core_type<tc>, window_params = [{transform_indices = @transform_0, window_bounds = array<i64: 16, 128>}, {transform_indices = @transform_1, window_bounds = array<i64: 128, 640>}, {transform_indices = @transform_2, window_bounds = array<i64: 16, 640>}]} {
    %c0 = arith.constant 0 : index
    %c0_0 = arith.constant 0 : index
    %0 = vector.load %arg2[%c0, %c0_0] : memref<16x128xbf16, #tpu.memory_space<vmem>>, vector<16x128xbf16>
    %c0_1 = arith.constant 0 : index
    %c0_2 = arith.constant 0 : index
    %1 = vector.load %arg3[%c0_1, %c0_2] : memref<128x640xbf16, #tpu.memory_space<vmem>>, vector<128x640xbf16>
    %cst = arith.constant dense<0.000000e+00> : vector<16x640xf32>
    %2 = tpu.matmul %0, %1, %cst {dimension_numbers = #tpu.dot_dimension_numbers<[1], [0], [0], [1], [0, 0, 1, 1], [], []>} : vector<16x128xbf16>, vector<128x640xbf16>, vector<16x640xf32> -> vector<16x640xf32>
    %3 = arith.truncf %2 : vector<16x640xf32> to vector<16x640xbf16>
    %c0_3 = arith.constant 0 : index
    %c0_4 = arith.constant 0 : index
    %4 = vector.load %arg4[%c0_3, %c0_4] : memref<16x640xbf16, #tpu.memory_space<vmem>>, vector<16x640xbf16>
    tpu.vector_store %arg4[%c0_3, %c0_4], %3 {strides = array<i32>} : memref<16x640xbf16, #tpu.memory_space<vmem>>, vector<16x640xbf16>,
    return
  }
  func.func @transform_0(%arg0: i32, %arg1: i32) -> (i32, i32) {
    %c1_i32 = arith.constant 1 : i32
    %c0_i32 = arith.constant 0 : i32
    return %arg0, %c1_i32 : i32, i32
  }
  func.func @transform_1(%arg0: i32, %arg1: i32) -> (i32, i32) {
    %c0_i32 = arith.constant 0 : i32
    %c0_i32_0 = arith.constant 0 : i32
    return %c0_i32, %arg1 : i32, i32
  }
  func.func @transform_2(%arg0: i32, %arg1: i32) -> (i32, i32) {
    %c0_i32 = arith.constant 0 : i32
    return %arg0, %arg1 : i32, i32
  }
}

module attributes {stable_mosaic.version = 11 : i64} {
  func.func @_biaffine_stage2_kernel(%arg0: i32, %arg1: i32, %arg2: memref<1x7x128xbf16, #tpu.memory_space<vmem>>, %arg3: memref<1x35x128xbf16, #tpu.memory_space<vmem>>, %arg4: memref<1x7x35xf32, #tpu.memory_space<vmem>>) attributes {dimension_semantics = [#tpu.dimension_semantics<parallel>, #tpu.dimension_semantics<parallel>], iteration_bounds = array<i64: 2, 1>, scalar_prefetch = 0 : i64, scratch_operands = 0 : i64, tpu.core_type = #tpu.core_type<tc>, window_params = [{transform_indices = @transform_0, window_bounds = array<i64: 1, 7, 128>}, {transform_indices = @transform_1, window_bounds = array<i64: 1, 35, 128>}, {transform_indices = @transform_2, window_bounds = array<i64: 1, 7, 35>}]} {
    %c0 = arith.constant 0 : index
    %c0_0 = arith.constant 0 : index
    %c0_1 = arith.constant 0 : index
    %0 = vector.load %arg2[%c0, %c0_0, %c0_1] : memref<1x7x128xbf16, #tpu.memory_space<vmem>>, vector<1x7x128xbf16>
    %1 = vector.shape_cast %0 : vector<1x7x128xbf16> to vector<7x128xbf16>
    %c0_2 = arith.constant 0 : index
    %c0_3 = arith.constant 0 : index
    %c0_4 = arith.constant 0 : index
    %2 = vector.load %arg3[%c0_2, %c0_3, %c0_4] : memref<1x35x128xbf16, #tpu.memory_space<vmem>>, vector<1x35x128xbf16>
    %3 = vector.shape_cast %2 : vector<1x35x128xbf16> to vector<35x128xbf16>
    %cst = arith.constant dense<0.000000e+00> : vector<7x35xf32>
    %4 = tpu.matmul %1, %3, %cst {dimension_numbers = #tpu.dot_dimension_numbers<[1], [1], [0], [0], [0, 0, 1, 0], [], []>} : vector<7x128xbf16>, vector<35x128xbf16>, vector<7x35xf32> -> vector<7x35xf32>
    %c0_5 = arith.constant 0 : index
    %c0_6 = arith.constant 0 : index
    %c0_7 = arith.constant 0 : index
    %5 = vector.load %arg4[%c0_5, %c0_6, %c0_7] : memref<1x7x35xf32, #tpu.memory_space<vmem>>, vector<1x7x35xf32>
    %6 = vector.shape_cast %5 : vector<1x7x35xf32> to vector<7x35xf32>
    %7 = vector.shape_cast %4 : vector<7x35xf32> to vector<1x7x35xf32>
    tpu.vector_store %arg4[%c0_5, %c0_6, %c0_7], %7 {strides = array<i32>} : memref<1x7x35xf32, #tpu.memory_space<vmem>>, vector<1x7x35xf32>,
    return
  }
  func.func @transform_0(%arg0: i32, %arg1: i32) -> (i32, i32, i32) {
    %c0_i32 = arith.constant 0 : i32
    %c0_i32_0 = arith.constant 0 : i32
    return %arg0, %arg1, %c0_i32 : i32, i32, i32
  }
  func.func @transform_1(%arg0: i32, %arg1: i32) -> (i32, i32, i32) {
    %c0_i32 = arith.constant 0 : i32
    %c0_i32_0 = arith.constant 0 : i32
    %c0_i32_1 = arith.constant 0 : i32
    return %arg0, %c0_i32, %c0_i32_0 : i32, i32, i32
  }
  func.func @transform_2(%arg0: i32, %arg1: i32) -> (i32, i32, i32) {
    %c0_i32 = arith.constant 0 : i32
    %c0_i32_0 = arith.constant 0 : i32
    return %arg0, %arg1, %c0_i32 : i32, i32, i32
  }
}

</mosaic_0001>

<llo_original>
// kernel: custom-call.6
$region0: #{custom-call.6}
  %s0 = inlined_call_operand.vmem [shape: bf16[2,32], index: 0, kind: output, shape index: {}]

// kernel: custom-call.7
$region0: #{custom-call.7}
  %s0 = inlined_call_operand.vmem [shape: f32[2,32], index: 0, kind: output, shape index: {}]

// kernel: crf_constituency_forward.7
$region0: #{crf_constituency_forward.7}
  #allocation0 [shape = 'u32[]', space=smem, size = 0x4, offset = 0x4, fixed_abs, tag = 'smem constant byte address 0x4 - core index']
  #allocation1 [shape = 'u32[72,128]{1,0:T(1,128)}', space=vmem, size = 0x9000, scoped, tag = 'internal scratch']
  %s0 = inlined_call_operand.vmem [shape: f32[16,16], index: 0, kind: input, shape index: {}]
  %s1 = inlined_call_operand.vmem [shape: bf16[16,256], index: 1, kind: input, shape index: {}]
  %s2 = inlined_call_operand.vmem [shape: f32[1,256], index: 2, kind: input, shape index: {}]
  %s3 = inlined_call_operand.vmem [shape: bf16[16,256], index: 3, kind: output, shape index: {}]
  %s4 = sld [smem:[#allocation0]]
  $region22: #{crf_constituency_forward.7} parent=0
    _
  %s6 = ssub.s32 1, %s4
  %s7 = scalar_select 0, %s6, %s4
  // Predicated region
  $region2: #{crf_constituency_forward.7} parent=0 // pred_check
    _
  $region3: #{crf_constituency_forward.7} parent=0 // pred_check_branch
    %9 = sbr.rel (0) target = $region5
  $region4: #{crf_constituency_forward.7} parent=0 // pred_region
    _
  $region5: #{crf_constituency_forward.7} parent=0 // pred_fallthru
    _
  // Predicated region
  $region6: #{crf_constituency_forward.7} parent=0 // pred_check
    _
  $region7: #{crf_constituency_forward.7} parent=0 // pred_check_branch
    %11 = sbr.rel (0) target = $region9
  $region8: #{crf_constituency_forward.7} parent=0 // pred_region
    _
  $region9: #{crf_constituency_forward.7} parent=0 // pred_fallthru
    _
  // Predicated region
  $region10: #{crf_constituency_forward.7} parent=0 // pred_check
    _
  $region11: #{crf_constituency_forward.7} parent=0 // pred_check_branch
    %13 = sbr.rel (0) target = $region13
  $region12: #{crf_constituency_forward.7} parent=0 // pred_region
    _
  $region13: #{crf_constituency_forward.7} parent=0 // pred_fallthru
    _
  %v15 = vld [vmem:[%s0] sm:$0xff]
  %v16 = vld [vmem:[%s0 + $0x8] sm:$0xff]
  %v17 = vpack.c.bf16 %v16, %v15
  %v18 = vld [vmem:[%s1] sm:$0xff]
  %v19 = vld [vmem:[%s1 + $0x8] sm:$0xff]
  %v20 = vld [vmem:[%s2] sm:$0x3]
  %v22 = vperm.slane %v20, 0
  %v23 = vperm.slane %v20, 1
  %v28 = vunpack.c.l.b16 %v18
  %v29 = vunpack.c.h.b16 %v18
  %v30 = vunpack.c.l.b16 %v19
  %v31 = vunpack.c.h.b16 %v19
  %v32 = vpack.c.b16 %v30, %v28
  %v33 = vpack.c.b16 %v31, %v29
  %vm36 = vcmask 130048
  %v38 = vsel %vm36, %v17, 0
  %40 = vmatpush.bf16.msra.mxu0 0
  %41 = vmatpush.bf16.msra.mxu0 0
  %42 = vmatpush.bf16.msra.mxu0 0
  %43 = vmatpush.bf16.msra.mxu0 0
  %44 = vmatpush.bf16.msra.mxu0 0
  %45 = vmatpush.bf16.msra.mxu0 0
  %46 = vmatpush.bf16.msra.mxu0 0
  %47 = vmatpush.bf16.msra.mxu0 %v32
  %48 = vmatmul.bf16.gmra.mxu0 %v38
  %v49 = vpop.f32.mrf.mxu0
  %v50 = vadd.f32 %v22, %v49
  %v51 = vpop.f32.mrf.mxu0
  %v52 = vadd.f32 %v22, %v51
  %53 = vdwg.mxu0
  %54 = vmatpush.bf16.msra.mxu0 0
  %55 = vmatpush.bf16.msra.mxu0 0
  %56 = vmatpush.bf16.msra.mxu0 0
  %57 = vmatpush.bf16.msra.mxu0 0
  %58 = vmatpush.bf16.msra.mxu0 0
  %59 = vmatpush.bf16.msra.mxu0 0
  %60 = vmatpush.bf16.msra.mxu0 0
  %61 = vmatpush.bf16.msra.mxu0 %v33
  %62 = vmatmul.bf16.gmra.mxu0 %v38
  %v63 = vpop.f32.mrf.mxu0
  %v64 = vadd.f32 %v23, %v63
  %v65 = vpop.f32.mrf.mxu0
  %v66 = vadd.f32 %v23, %v65
  %67 = vdwg.mxu0
  %v68 = vpack.c.bf16 %v64, %v50
  %v69 = vpack.c.bf16 %v66, %v52
  %70 = vst [vmem:[%s3] sm:$0xff] %v68
  %71 = vst [vmem:[%s3 + $0x8] sm:$0xff] %v69
  // Predicated region
  $region14: #{crf_constituency_forward.7} parent=0 // pred_check
    _
  $region15: #{crf_constituency_forward.7} parent=0 // pred_check_branch
    %73 = sbr.rel (0) target = $region17
  $region16: #{crf_constituency_forward.7} parent=0 // pred_region
    _
  $region17: #{crf_constituency_forward.7} parent=0 // pred_fallthru
    _
  // Predicated region
  $region18: #{crf_constituency_forward.7} parent=0 // pred_check
    _
  $region19: #{crf_constituency_forward.7} parent=0 // pred_check_branch
    %75 = sbr.rel (0) target = $region21
  $region20: #{crf_constituency_forward.7} parent=0 // pred_region
    _
  $region21: #{crf_constituency_forward.7} parent=0 // pred_fallthru
    _

// kernel: crf_constituency_forward.8
$region0: #{crf_constituency_forward.8}
  #allocation0 [shape = 'u32[]', space=smem, size = 0x4, offset = 0x4, fixed_abs, tag = 'smem constant byte address 0x4 - core index']
  #allocation1 [shape = 'u32[72,128]{1,0:T(1,128)}', space=vmem, size = 0x9000, scoped, tag = 'internal scratch']
  %s0 = inlined_call_operand.vmem [shape: f32[16,64], index: 0, kind: input, shape index: {}]
  %s1 = inlined_call_operand.vmem [shape: bf16[64,256], index: 1, kind: input, shape index: {}]
  %s2 = inlined_call_operand.vmem [shape: f32[1,256], index: 2, kind: input, shape index: {}]
  %s3 = inlined_call_operand.vmem [shape: bf16[16,256], index: 3, kind: output, shape index: {}]
  %s4 = sld [smem:[#allocation0]]
  $region22: #{crf_constituency_forward.8} parent=0
    _
  %s6 = ssub.s32 1, %s4
  %s7 = scalar_select 0, %s6, %s4
  // Predicated region
  $region2: #{crf_constituency_forward.8} parent=0 // pred_check
    _
  $region3: #{crf_constituency_forward.8} parent=0 // pred_check_branch
    %9 = sbr.rel (0) target = $region5
  $region4: #{crf_constituency_forward.8} parent=0 // pred_region
    _
  $region5: #{crf_constituency_forward.8} parent=0 // pred_fallthru
    _
  // Predicated region
  $region6: #{crf_constituency_forward.8} parent=0 // pred_check
    _
  $region7: #{crf_constituency_forward.8} parent=0 // pred_check_branch
    %11 = sbr.rel (0) target = $region9
  $region8: #{crf_constituency_forward.8} parent=0 // pred_region
    _
  $region9: #{crf_constituency_forward.8} parent=0 // pred_fallthru
    _
  // Predicated region
  $region10: #{crf_constituency_forward.8} parent=0 // pred_check
    _
  $region11: #{crf_constituency_forward.8} parent=0 // pred_check_branch
    %13 = sbr.rel (0) target = $region13
  $region12: #{crf_constituency_forward.8} parent=0 // pred_region
    _
  $region13: #{crf_constituency_forward.8} parent=0 // pred_fallthru
    _
  %v15 = vld [vmem:[%s0] sm:$0xff]
  %v16 = vld [vmem:[%s0 + $0x8] sm:$0xff]
  %v17 = vpack.c.bf16 %v16, %v15
  %v18 = vld [vmem:[%s1] sm:$0xff]
  %v19 = vld [vmem:[%s1 + $0x8] sm:$0xff]
  %v20 = vld [vmem:[%s1 + $0x10] sm:$0xff]
  %v21 = vld [vmem:[%s1 + $0x18] sm:$0xff]
  %v22 = vld [vmem:[%s1 + $0x20] sm:$0xff]
  %v23 = vld [vmem:[%s1 + $0x28] sm:$0xff]
  %v24 = vld [vmem:[%s1 + $0x30] sm:$0xff]
  %v25 = vld [vmem:[%s1 + $0x38] sm:$0xff]
  %v26 = vld [vmem:[%s2] sm:$0x3]
  %v28 = vperm.slane %v26, 0
  %v29 = vperm.slane %v26, 1
  %v40 = vunpack.c.l.b16 %v18
  %v41 = vunpack.c.h.b16 %v18
  %v42 = vunpack.c.l.b16 %v19
  %v43 = vunpack.c.h.b16 %v19
  %v44 = vunpack.c.l.b16 %v20
  %v45 = vunpack.c.h.b16 %v20
  %v46 = vunpack.c.l.b16 %v21
  %v47 = vunpack.c.h.b16 %v21
  %v48 = vunpack.c.l.b16 %v22
  %v49 = vunpack.c.h.b16 %v22
  %v50 = vunpack.c.l.b16 %v23
  %v51 = vunpack.c.h.b16 %v23
  %v52 = vunpack.c.l.b16 %v24
  %v53 = vunpack.c.h.b16 %v24
  %v54 = vunpack.c.l.b16 %v25
  %v55 = vunpack.c.h.b16 %v25
  %v56 = vpack.c.b16 %v42, %v40
  %v57 = vpack.c.b16 %v43, %v41
  %v58 = vpack.c.b16 %v46, %v44
  %v59 = vpack.c.b16 %v47, %v45
  %v60 = vpack.c.b16 %v50, %v48
  %v61 = vpack.c.b16 %v51, %v49
  %v62 = vpack.c.b16 %v54, %v52
  %v63 = vpack.c.b16 %v55, %v53
  %vm72 = vcmask 523264
  %v74 = vsel %vm72, %v17, 0
  %76 = vmatpush.bf16.msra.mxu0 0
  %77 = vmatpush.bf16.msra.mxu0 0
  %78 = vmatpush.bf16.msra.mxu0 0
  %79 = vmatpush.bf16.msra.mxu0 0
  %80 = vmatpush.bf16.msra.mxu0 %v62
  %81 = vmatpush.bf16.msra.mxu0 %v60
  %82 = vmatpush.bf16.msra.mxu0 %v58
  %83 = vmatpush.bf16.msra.mxu0 %v56
  %84 = vmatmul.bf16.gmra.mxu0 %v74
  %v85 = vpop.f32.mrf.mxu0
  %v86 = vadd.f32 %v28, %v85
  %v87 = vpop.f32.mrf.mxu0
  %v88 = vadd.f32 %v28, %v87
  %89 = vdwg.mxu0
  %90 = vmatpush.bf16.msra.mxu0 0
  %91 = vmatpush.bf16.msra.mxu0 0
  %92 = vmatpush.bf16.msra.mxu0 0
  %93 = vmatpush.bf16.msra.mxu0 0
  %94 = vmatpush.bf16.msra.mxu0 %v63
  %95 = vmatpush.bf16.msra.mxu0 %v61
  %96 = vmatpush.bf16.msra.mxu0 %v59
  %97 = vmatpush.bf16.msra.mxu0 %v57
  %98 = vmatmul.bf16.gmra.mxu0 %v74
  %v99 = vpop.f32.mrf.mxu0
  %v100 = vadd.f32 %v29, %v99
  %v101 = vpop.f32.mrf.mxu0
  %v102 = vadd.f32 %v29, %v101
  %103 = vdwg.mxu0
  %v104 = vpack.c.bf16 %v100, %v86
  %v105 = vpack.c.bf16 %v102, %v88
  %106 = vst [vmem:[%s3] sm:$0xff] %v104
  %107 = vst [vmem:[%s3 + $0x8] sm:$0xff] %v105
  // Predicated region
  $region14: #{crf_constituency_forward.8} parent=0 // pred_check
    _
  $region15: #{crf_constituency_forward.8} parent=0 // pred_check_branch
    %109 = sbr.rel (0) target = $region17
  $region16: #{crf_constituency_forward.8} parent=0 // pred_region
    _
  $region17: #{crf_constituency_forward.8} parent=0 // pred_fallthru
    _
  // Predicated region
  $region18: #{crf_constituency_forward.8} parent=0 // pred_check
    _
  $region19: #{crf_constituency_forward.8} parent=0 // pred_check_branch
    %111 = sbr.rel (0) target = $region21
  $region20: #{crf_constituency_forward.8} parent=0 // pred_region
    _
  $region21: #{crf_constituency_forward.8} parent=0 // pred_fallthru
    _

// kernel: crf_constituency_forward.11
$region0: #{crf_constituency_forward.11}
  #allocation0 [shape = 'u32[]', space=smem, size = 0x4, offset = 0x4, fixed_abs, tag = 'smem constant byte address 0x4 - core index']
  #allocation1 [shape = 'u32[72,128]{1,0:T(1,128)}', space=vmem, size = 0x9000, scoped, tag = 'internal scratch']
  %s0 = inlined_call_operand.vmem [shape: bf16[16,512], index: 0, kind: input, shape index: {}]
  %s1 = inlined_call_operand.vmem [shape: bf16[128,384], index: 1, kind: input, shape index: {}]
  %s2 = inlined_call_operand.vmem [shape: bf16[16,384], index: 2, kind: output, shape index: {}]
  %s3 = sld [smem:[#allocation0]]
  $region59: #{crf_constituency_forward.11} parent=0
    _
  %s5 = ssub.s32 1, %s3
  %s6 = scalar_select 0, %s5, %s3
  $region1: #{crf_constituency_forward.11} parent=0
    #allocation2 [shape = 'u8[4096]{0}', space=vmem, size = 0x1000, scoped, tag = 'input window, operand 0, single buffered']
    // Predicated region
    $region2: #{crf_constituency_forward.11} parent=1 // pred_check
      _
    $region3: #{crf_constituency_forward.11} parent=1 // pred_check_branch
      %8 = sbr.rel (0) target = $region5
    $region4: #{crf_constituency_forward.11} parent=1 // pred_region
      %s9 = scalar_lea.vmem %s0, 12
      // Predicated region
      $region6: #{crf_constituency_forward.11} parent=4 // pred_check
        _
      $region7: #{crf_constituency_forward.11} parent=4 // pred_check_branch
        %11 = sbr.rel (0) target = $region9
      $region8: #{crf_constituency_forward.11} parent=4 // pred_region
        // Predicated region
        $region10: #{crf_constituency_forward.11} parent=8 // pred_check
          _
        $region11: #{crf_constituency_forward.11} parent=8 // pred_check_branch
          %13 = sbr.rel target = $region13
        $region12: #{crf_constituency_forward.11} parent=8 // pred_region
          // Predicated region
          $region25: #{crf_constituency_forward.11} parent=12 // pred_check
            _
          $region26: #{crf_constituency_forward.11} parent=12 // pred_check_branch
            %31 = sbr.rel (0) target = $region28
          $region27: #{crf_constituency_forward.11} parent=12 // pred_region
            loop: start=0, step=1, limit=1
            $region29: #{crf_constituency_forward.11} parent=27 // loop_pre_header
              _
            $region30: #{crf_constituency_forward.11} parent=27 // loop_header
              %s33 = sphi 0, %s37
              %p34 = scmp.ge.s32.totalorder %s33, 1
              %s38 = sphi %s9, %s9
              %s39 = sphi [#allocation2], [#allocation2]
            $region31: #{crf_constituency_forward.11} parent=27 // loop_header_branch
              %36 = sbr.rel (%p34) target = $region35
            $region32: #{crf_constituency_forward.11} parent=27 // loop_body
              _
            $region33: #{crf_constituency_forward.11} parent=27 // loop_footer
              %s37 = sadd.s32 1, %s33
            $region34: #{crf_constituency_forward.11} parent=27 // loop_footer_branch
              %32 = sbr.rel target = $region30
            $region35: #{crf_constituency_forward.11} parent=27 // loop_exit
              _
            %s41 = ssub.s32 16, 1
            loop: start=0, step=1, limit=1
            $region36: #{crf_constituency_forward.11} parent=27 // loop_pre_header
              _
            $region37: #{crf_constituency_forward.11} parent=27 // loop_header
              %s43 = sphi 0, %s47
              %p44 = scmp.ge.s32.totalorder %s43, 1
              %s48 = sphi %s9, %s9
              %s49 = sphi [#allocation2], [#allocation2]
            $region38: #{crf_constituency_forward.11} parent=27 // loop_header_branch
              %46 = sbr.rel (%p44) target = $region42
            $region39: #{crf_constituency_forward.11} parent=27 // loop_body
              %v50 = vld [vmem:[%s48] sm:%s41]
              %51 = vst [vmem:[%s49] sm:%s41] %v50
              %v52 = vld [vmem:[%s48 + $0x10] sm:%s41]
              %53 = vst [vmem:[%s49 + $0x4] sm:%s41] %v52
            $region40: #{crf_constituency_forward.11} parent=27 // loop_footer
              %s47 = sadd.s32 1, %s43
            $region41: #{crf_constituency_forward.11} parent=27 // loop_footer_branch
              %42 = sbr.rel target = $region37
            $region42: #{crf_constituency_forward.11} parent=27 // loop_exit
              _
          $region28: #{crf_constituency_forward.11} parent=12 // pred_fallthru
            _
        $region13: #{crf_constituency_forward.11} parent=8 // pred_fallthru
          _
        // Predicated region
        $region14: #{crf_constituency_forward.11} parent=8 // pred_check
          _
        $region15: #{crf_constituency_forward.11} parent=8 // pred_check_branch
          %15 = sbr.rel (0) target = $region17
        $region16: #{crf_constituency_forward.11} parent=8 // pred_region
          %s17 = ssub.s32 16, 1
          loop: start=0, step=1, limit=1
          $region18: #{crf_constituency_forward.11} parent=16 // loop_pre_header
            _
          $region19: #{crf_constituency_forward.11} parent=16 // loop_header
            %s19 = sphi 0, %s23
            %p20 = scmp.ge.s32.totalorder %s19, 1
            %s24 = sphi %s9, %s9
            %s25 = sphi [#allocation2], [#allocation2]
          $region20: #{crf_constituency_forward.11} parent=16 // loop_header_branch
            %22 = sbr.rel (%p20) target = $region24
          $region21: #{crf_constituency_forward.11} parent=16 // loop_body
            %v26 = vld [vmem:[%s24] sm:%s17]
            %27 = vst [vmem:[%s25] sm:%s17] %v26
            %v28 = vld [vmem:[%s24 + $0x10] sm:%s17]
            %29 = vst [vmem:[%s25 + $0x4] sm:%s17] %v28
          $region22: #{crf_constituency_forward.11} parent=16 // loop_footer
            %s23 = sadd.s32 1, %s19
          $region23: #{crf_constituency_forward.11} parent=16 // loop_footer_branch
            %18 = sbr.rel target = $region19
          $region24: #{crf_constituency_forward.11} parent=16 // loop_exit
            _
        $region17: #{crf_constituency_forward.11} parent=8 // pred_fallthru
          _
      $region9: #{crf_constituency_forward.11} parent=4 // pred_fallthru
        _
      %54 = vnop
    $region5: #{crf_constituency_forward.11} parent=1 // pred_fallthru
      _
    // Predicated region
    $region43: #{crf_constituency_forward.11} parent=1 // pred_check
      _
    $region44: #{crf_constituency_forward.11} parent=1 // pred_check_branch
      %56 = sbr.rel (0) target = $region46
    $region45: #{crf_constituency_forward.11} parent=1 // pred_region
      _
    $region46: #{crf_constituency_forward.11} parent=1 // pred_fallthru
      _
    // Predicated region
    $region47: #{crf_constituency_forward.11} parent=1 // pred_check
      _
    $region48: #{crf_constituency_forward.11} parent=1 // pred_check_branch
      %58 = sbr.rel (0) target = $region50
    $region49: #{crf_constituency_forward.11} parent=1 // pred_region
      _
    $region50: #{crf_constituency_forward.11} parent=1 // pred_fallthru
      _
    %v59 = vld [vmem:[#allocation2] sm:$0xf]
    %v60 = vld [vmem:[#allocation2 + $0x4] sm:$0xf]
    %v61 = vld [vmem:[%s1] sm:$0xff]
    %v62 = vld [vmem:[%s1 + $0x8] sm:$0xf]
    %v63 = vld [vmem:[%s1 + $0xc] sm:$0xff]
    %v64 = vld [vmem:[%s1 + $0x14] sm:$0xf]
    %v65 = vld [vmem:[%s1 + $0x18] sm:$0xff]
    %v66 = vld [vmem:[%s1 + $0x20] sm:$0xf]
    %v67 = vld [vmem:[%s1 + $0x24] sm:$0xff]
    %v68 = vld [vmem:[%s1 + $0x2c] sm:$0xf]
    %v69 = vld [vmem:[%s1 + $0x30] sm:$0xff]
    %v70 = vld [vmem:[%s1 + $0x38] sm:$0xf]
    %v71 = vld [vmem:[%s1 + $0x3c] sm:$0xff]
    %v72 = vld [vmem:[%s1 + $0x44] sm:$0xf]
    %v73 = vld [vmem:[%s1 + $0x48] sm:$0xff]
    %v74 = vld [vmem:[%s1 + $0x50] sm:$0xf]
    %v75 = vld [vmem:[%s1 + $0x54] sm:$0xff]
    %v76 = vld [vmem:[%s1 + $0x5c] sm:$0xf]
    %v77 = vld [vmem:[%s1 + $0x60] sm:$0xff]
    %v78 = vld [vmem:[%s1 + $0x68] sm:$0xf]
    %v79 = vld [vmem:[%s1 + $0x6c] sm:$0xff]
    %v80 = vld [vmem:[%s1 + $0x74] sm:$0xf]
    %v81 = vld [vmem:[%s1 + $0x78] sm:$0xff]
    %v82 = vld [vmem:[%s1 + $0x80] sm:$0xf]
    %v83 = vld [vmem:[%s1 + $0x84] sm:$0xff]
    %v84 = vld [vmem:[%s1 + $0x8c] sm:$0xf]
    %v85 = vld [vmem:[%s1 + $0x90] sm:$0xff]
    %v86 = vld [vmem:[%s1 + $0x98] sm:$0xf]
    %v87 = vld [vmem:[%s1 + $0x9c] sm:$0xff]
    %v88 = vld [vmem:[%s1 + $0xa4] sm:$0xf]
    %v89 = vld [vmem:[%s1 + $0xa8] sm:$0xff]
    %v90 = vld [vmem:[%s1 + $0xb0] sm:$0xf]
    %v91 = vld [vmem:[%s1 + $0xb4] sm:$0xff]
    %v92 = vld [vmem:[%s1 + $0xbc] sm:$0xf]
    %v95 = vunpack.c.l.b16 %v59
    %v96 = vunpack.c.l.b16 %v60
    %v97 = vpack.c.b16 %v96, %v95
    %v131 = vunpack.c.l.b16 %v61
    %v132 = vunpack.c.h.b16 %v61
    %v133 = vunpack.c.l.b16 %v62
    %v134 = vunpack.c.l.b16 %v63
    %v135 = vunpack.c.h.b16 %v63
    %v136 = vunpack.c.l.b16 %v64
    %v137 = vunpack.c.l.b16 %v65
    %v138 = vunpack.c.h.b16 %v65
    %v139 = vunpack.c.l.b16 %v66
    %v140 = vunpack.c.l.b16 %v67
    %v141 = vunpack.c.h.b16 %v67
    %v142 = vunpack.c.l.b16 %v68
    %v143 = vunpack.c.l.b16 %v69
    %v144 = vunpack.c.h.b16 %v69
    %v145 = vunpack.c.l.b16 %v70
    %v146 = vunpack.c.l.b16 %v71
    %v147 = vunpack.c.h.b16 %v71
    %v148 = vunpack.c.l.b16 %v72
    %v149 = vunpack.c.l.b16 %v73
    %v150 = vunpack.c.h.b16 %v73
    %v151 = vunpack.c.l.b16 %v74
    %v152 = vunpack.c.l.b16 %v75
    %v153 = vunpack.c.h.b16 %v75
    %v154 = vunpack.c.l.b16 %v76
    %v155 = vunpack.c.l.b16 %v77
    %v156 = vunpack.c.h.b16 %v77
    %v157 = vunpack.c.l.b16 %v78
    %v158 = vunpack.c.l.b16 %v79
    %v159 = vunpack.c.h.b16 %v79
    %v160 = vunpack.c.l.b16 %v80
    %v161 = vunpack.c.l.b16 %v81
    %v162 = vunpack.c.h.b16 %v81
    %v163 = vunpack.c.l.b16 %v82
    %v164 = vunpack.c.l.b16 %v83
    %v165 = vunpack.c.h.b16 %v83
    %v166 = vunpack.c.l.b16 %v84
    %v167 = vunpack.c.l.b16 %v85
    %v168 = vunpack.c.h.b16 %v85
    %v169 = vunpack.c.l.b16 %v86
    %v170 = vunpack.c.l.b16 %v87
    %v171 = vunpack.c.h.b16 %v87
    %v172 = vunpack.c.l.b16 %v88
    %v173 = vunpack.c.l.b16 %v89
    %v174 = vunpack.c.h.b16 %v89
    %v175 = vunpack.c.l.b16 %v90
    %v176 = vunpack.c.l.b16 %v91
    %v177 = vunpack.c.h.b16 %v91
    %v178 = vunpack.c.l.b16 %v92
    %v179 = vpack.c.b16 %v134, %v131
    %v180 = vpack.c.b16 %v135, %v132
    %v181 = vpack.c.b16 %v136, %v133
    %v182 = vpack.c.b16 %v140, %v137
    %v183 = vpack.c.b16 %v141, %v138
    %v184 = vpack.c.b16 %v142, %v139
    %v185 = vpack.c.b16 %v146, %v143
    %v186 = vpack.c.b16 %v147, %v144
    %v187 = vpack.c.b16 %v148, %v145
    %v188 = vpack.c.b16 %v152, %v149
    %v189 = vpack.c.b16 %v153, %v150
    %v190 = vpack.c.b16 %v154, %v151
    %v191 = vpack.c.b16 %v158, %v155
    %v192 = vpack.c.b16 %v159, %v156
    %v193 = vpack.c.b16 %v160, %v157
    %v194 = vpack.c.b16 %v164, %v161
    %v195 = vpack.c.b16 %v165, %v162
    %v196 = vpack.c.b16 %v166, %v163
    %v197 = vpack.c.b16 %v170, %v167
    %v198 = vpack.c.b16 %v171, %v168
    %v199 = vpack.c.b16 %v172, %v169
    %v200 = vpack.c.b16 %v176, %v173
    %v201 = vpack.c.b16 %v177, %v174
    %v202 = vpack.c.b16 %v178, %v175
    %227 = vmatpush.bf16.msra.mxu0 %v200
    %228 = vmatpush.bf16.msra.mxu0 %v197
    %229 = vmatpush.bf16.msra.mxu0 %v194
    %230 = vmatpush.bf16.msra.mxu0 %v191
    %231 = vmatpush.bf16.msra.mxu0 %v188
    %232 = vmatpush.bf16.msra.mxu0 %v185
    %233 = vmatpush.bf16.msra.mxu0 %v182
    %234 = vmatpush.bf16.msra.mxu0 %v179
    %235 = vmatmul.bf16.gmra.mxu0 %v97
    %v236 = vpop.f32.mrf.mxu0
    %v237 = vadd.f32 0.0, %v236
    %v238 = vpop.f32.mrf.mxu0
    %v239 = vadd.f32 0.0, %v238
    %240 = vdwg.mxu0
    %241 = vmatpush.bf16.msra.mxu0 %v201
    %242 = vmatpush.bf16.msra.mxu0 %v198
    %243 = vmatpush.bf16.msra.mxu0 %v195
    %244 = vmatpush.bf16.msra.mxu0 %v192
    %245 = vmatpush.bf16.msra.mxu0 %v189
    %246 = vmatpush.bf16.msra.mxu0 %v186
    %247 = vmatpush.bf16.msra.mxu0 %v183
    %248 = vmatpush.bf16.msra.mxu0 %v180
    %249 = vmatmul.bf16.gmra.mxu0 %v97
    %v250 = vpop.f32.mrf.mxu0
    %v251 = vadd.f32 0.0, %v250
    %v252 = vpop.f32.mrf.mxu0
    %v253 = vadd.f32 0.0, %v252
    %254 = vdwg.mxu0
    %255 = vmatpush.bf16.msra.mxu0 %v202
    %256 = vmatpush.bf16.msra.mxu0 %v199
    %257 = vmatpush.bf16.msra.mxu0 %v196
    %258 = vmatpush.bf16.msra.mxu0 %v193
    %259 = vmatpush.bf16.msra.mxu0 %v190
    %260 = vmatpush.bf16.msra.mxu0 %v187
    %261 = vmatpush.bf16.msra.mxu0 %v184
    %262 = vmatpush.bf16.msra.mxu0 %v181
    %263 = vmatmul.bf16.gmra.mxu0 %v97
    %v264 = vpop.f32.mrf.mxu0
    %v265 = vadd.f32 0.0, %v264
    %v266 = vpop.f32.mrf.mxu0
    %v267 = vadd.f32 0.0, %v266
    %268 = vdwg.mxu0
    %v269 = vpack.c.bf16 %v251, %v237
    %v270 = vpack.c.bf16 %v265, %v265
    %v271 = vpack.c.bf16 %v253, %v239
    %v272 = vpack.c.bf16 %v267, %v267
    %273 = vst [vmem:[%s2] sm:$0xff] %v269
    %274 = vst [vmem:[%s2 + $0x8] sm:$0xf] %v270
    %275 = vst [vmem:[%s2 + $0xc] sm:$0xff] %v271
    %276 = vst [vmem:[%s2 + $0x14] sm:$0xf] %v272
    // Predicated region
    $region51: #{crf_constituency_forward.11} parent=1 // pred_check
      _
    $region52: #{crf_constituency_forward.11} parent=1 // pred_check_branch
      %278 = sbr.rel (0) target = $region54
    $region53: #{crf_constituency_forward.11} parent=1 // pred_region
      _
    $region54: #{crf_constituency_forward.11} parent=1 // pred_fallthru
      _
    // Predicated region
    $region55: #{crf_constituency_forward.11} parent=1 // pred_check
      _
    $region56: #{crf_constituency_forward.11} parent=1 // pred_check_branch
      %280 = sbr.rel (0) target = $region58
    $region57: #{crf_constituency_forward.11} parent=1 // pred_region
      _
    $region58: #{crf_constituency_forward.11} parent=1 // pred_fallthru
      _

// kernel: crf_constituency_forward.9
$region0: #{crf_constituency_forward.9}
  #allocation0 [shape = 'u32[]', space=smem, size = 0x4, offset = 0x4, fixed_abs, tag = 'smem constant byte address 0x4 - core index']
  #allocation1 [shape = 'u32[72,128]{1,0:T(1,128)}', space=vmem, size = 0x9000, scoped, tag = 'internal scratch']
  %s0 = inlined_call_operand.vmem [shape: f32[16,64], index: 0, kind: input, shape index: {}]
  %s1 = inlined_call_operand.vmem [shape: bf16[64,512], index: 1, kind: input, shape index: {}]
  %s2 = inlined_call_operand.vmem [shape: f32[1,512], index: 2, kind: input, shape index: {}]
  %s3 = inlined_call_operand.vmem [shape: bf16[16,512], index: 3, kind: output, shape index: {}]
  %s4 = sld [smem:[#allocation0]]
  $region22: #{crf_constituency_forward.9} parent=0
    _
  %s6 = ssub.s32 1, %s4
  %s7 = scalar_select 0, %s6, %s4
  // Predicated region
  $region2: #{crf_constituency_forward.9} parent=0 // pred_check
    _
  $region3: #{crf_constituency_forward.9} parent=0 // pred_check_branch
    %9 = sbr.rel (0) target = $region5
  $region4: #{crf_constituency_forward.9} parent=0 // pred_region
    _
  $region5: #{crf_constituency_forward.9} parent=0 // pred_fallthru
    _
  // Predicated region
  $region6: #{crf_constituency_forward.9} parent=0 // pred_check
    _
  $region7: #{crf_constituency_forward.9} parent=0 // pred_check_branch
    %11 = sbr.rel (0) target = $region9
  $region8: #{crf_constituency_forward.9} parent=0 // pred_region
    _
  $region9: #{crf_constituency_forward.9} parent=0 // pred_fallthru
    _
  // Predicated region
  $region10: #{crf_constituency_forward.9} parent=0 // pred_check
    _
  $region11: #{crf_constituency_forward.9} parent=0 // pred_check_branch
    %13 = sbr.rel (0) target = $region13
  $region12: #{crf_constituency_forward.9} parent=0 // pred_region
    _
  $region13: #{crf_constituency_forward.9} parent=0 // pred_fallthru
    _
  %v15 = vld [vmem:[%s0] sm:$0xff]
  %v16 = vld [vmem:[%s0 + $0x8] sm:$0xff]
  %v17 = vpack.c.bf16 %v16, %v15
  %v18 = vld [vmem:[%s1] sm:$0xff]
  %v19 = vld [vmem:[%s1 + $0x8] sm:$0xff]
  %v20 = vld [vmem:[%s1 + $0x10] sm:$0xff]
  %v21 = vld [vmem:[%s1 + $0x18] sm:$0xff]
  %v22 = vld [vmem:[%s1 + $0x20] sm:$0xff]
  %v23 = vld [vmem:[%s1 + $0x28] sm:$0xff]
  %v24 = vld [vmem:[%s1 + $0x30] sm:$0xff]
  %v25 = vld [vmem:[%s1 + $0x38] sm:$0xff]
  %v26 = vld [vmem:[%s1 + $0x40] sm:$0xff]
  %v27 = vld [vmem:[%s1 + $0x48] sm:$0xff]
  %v28 = vld [vmem:[%s1 + $0x50] sm:$0xff]
  %v29 = vld [vmem:[%s1 + $0x58] sm:$0xff]
  %v30 = vld [vmem:[%s1 + $0x60] sm:$0xff]
  %v31 = vld [vmem:[%s1 + $0x68] sm:$0xff]
  %v32 = vld [vmem:[%s1 + $0x70] sm:$0xff]
  %v33 = vld [vmem:[%s1 + $0x78] sm:$0xff]
  %v34 = vld [vmem:[%s2] sm:$0xf]
  %v36 = vperm.slane %v34, 0
  %v37 = vperm.slane %v34, 1
  %v38 = vperm.slane %v34, 2
  %v39 = vperm.slane %v34, 3
  %v60 = vunpack.c.l.b16 %v18
  %v61 = vunpack.c.h.b16 %v18
  %v62 = vunpack.c.l.b16 %v19
  %v63 = vunpack.c.h.b16 %v19
  %v64 = vunpack.c.l.b16 %v20
  %v65 = vunpack.c.h.b16 %v20
  %v66 = vunpack.c.l.b16 %v21
  %v67 = vunpack.c.h.b16 %v21
  %v68 = vunpack.c.l.b16 %v22
  %v69 = vunpack.c.h.b16 %v22
  %v70 = vunpack.c.l.b16 %v23
  %v71 = vunpack.c.h.b16 %v23
  %v72 = vunpack.c.l.b16 %v24
  %v73 = vunpack.c.h.b16 %v24
  %v74 = vunpack.c.l.b16 %v25
  %v75 = vunpack.c.h.b16 %v25
  %v76 = vunpack.c.l.b16 %v26
  %v77 = vunpack.c.h.b16 %v26
  %v78 = vunpack.c.l.b16 %v27
  %v79 = vunpack.c.h.b16 %v27
  %v80 = vunpack.c.l.b16 %v28
  %v81 = vunpack.c.h.b16 %v28
  %v82 = vunpack.c.l.b16 %v29
  %v83 = vunpack.c.h.b16 %v29
  %v84 = vunpack.c.l.b16 %v30
  %v85 = vunpack.c.h.b16 %v30
  %v86 = vunpack.c.l.b16 %v31
  %v87 = vunpack.c.h.b16 %v31
  %v88 = vunpack.c.l.b16 %v32
  %v89 = vunpack.c.h.b16 %v32
  %v90 = vunpack.c.l.b16 %v33
  %v91 = vunpack.c.h.b16 %v33
  %v92 = vpack.c.b16 %v64, %v60
  %v93 = vpack.c.b16 %v65, %v61
  %v94 = vpack.c.b16 %v66, %v62
  %v95 = vpack.c.b16 %v67, %v63
  %v96 = vpack.c.b16 %v72, %v68
  %v97 = vpack.c.b16 %v73, %v69
  %v98 = vpack.c.b16 %v74, %v70
  %v99 = vpack.c.b16 %v75, %v71
  %v100 = vpack.c.b16 %v80, %v76
  %v101 = vpack.c.b16 %v81, %v77
  %v102 = vpack.c.b16 %v82, %v78
  %v103 = vpack.c.b16 %v83, %v79
  %v104 = vpack.c.b16 %v88, %v84
  %v105 = vpack.c.b16 %v89, %v85
  %v106 = vpack.c.b16 %v90, %v86
  %v107 = vpack.c.b16 %v91, %v87
  %vm124 = vcmask 523264
  %v126 = vsel %vm124, %v17, 0
  %128 = vmatpush.bf16.msra.mxu0 0
  %129 = vmatpush.bf16.msra.mxu0 0
  %130 = vmatpush.bf16.msra.mxu0 0
  %131 = vmatpush.bf16.msra.mxu0 0
  %132 = vmatpush.bf16.msra.mxu0 %v104
  %133 = vmatpush.bf16.msra.mxu0 %v100
  %134 = vmatpush.bf16.msra.mxu0 %v96
  %135 = vmatpush.bf16.msra.mxu0 %v92
  %136 = vmatmul.bf16.gmra.mxu0 %v126
  %v137 = vpop.f32.mrf.mxu0
  %v138 = vadd.f32 %v36, %v137
  %v139 = vpop.f32.mrf.mxu0
  %v140 = vadd.f32 %v36, %v139
  %141 = vdwg.mxu0
  %142 = vmatpush.bf16.msra.mxu0 0
  %143 = vmatpush.bf16.msra.mxu0 0
  %144 = vmatpush.bf16.msra.mxu0 0
  %145 = vmatpush.bf16.msra.mxu0 0
  %146 = vmatpush.bf16.msra.mxu0 %v105
  %147 = vmatpush.bf16.msra.mxu0 %v101
  %148 = vmatpush.bf16.msra.mxu0 %v97
  %149 = vmatpush.bf16.msra.mxu0 %v93
  %150 = vmatmul.bf16.gmra.mxu0 %v126
  %v151 = vpop.f32.mrf.mxu0
  %v152 = vadd.f32 %v37, %v151
  %v153 = vpop.f32.mrf.mxu0
  %v154 = vadd.f32 %v37, %v153
  %155 = vdwg.mxu0
  %156 = vmatpush.bf16.msra.mxu0 0
  %157 = vmatpush.bf16.msra.mxu0 0
  %158 = vmatpush.bf16.msra.mxu0 0
  %159 = vmatpush.bf16.msra.mxu0 0
  %160 = vmatpush.bf16.msra.mxu0 %v106
  %161 = vmatpush.bf16.msra.mxu0 %v102
  %162 = vmatpush.bf16.msra.mxu0 %v98
  %163 = vmatpush.bf16.msra.mxu0 %v94
  %164 = vmatmul.bf16.gmra.mxu0 %v126
  %v165 = vpop.f32.mrf.mxu0
  %v166 = vadd.f32 %v38, %v165
  %v167 = vpop.f32.mrf.mxu0
  %v168 = vadd.f32 %v38, %v167
  %169 = vdwg.mxu0
  %170 = vmatpush.bf16.msra.mxu0 0
  %171 = vmatpush.bf16.msra.mxu0 0
  %172 = vmatpush.bf16.msra.mxu0 0
  %173 = vmatpush.bf16.msra.mxu0 0
  %174 = vmatpush.bf16.msra.mxu0 %v107
  %175 = vmatpush.bf16.msra.mxu0 %v103
  %176 = vmatpush.bf16.msra.mxu0 %v99
  %177 = vmatpush.bf16.msra.mxu0 %v95
  %178 = vmatmul.bf16.gmra.mxu0 %v126
  %v179 = vpop.f32.mrf.mxu0
  %v180 = vadd.f32 %v39, %v179
  %v181 = vpop.f32.mrf.mxu0
  %v182 = vadd.f32 %v39, %v181
  %183 = vdwg.mxu0
  %vm184 = vcmp.gt.f32.partialorder %v138, 0.0
  %vm185 = vcmp.gt.f32.partialorder %v152, 0.0
  %vm186 = vcmp.gt.f32.partialorder %v166, 0.0
  %vm187 = vcmp.gt.f32.partialorder %v180, 0.0
  %vm188 = vcmp.gt.f32.partialorder %v140, 0.0
  %vm189 = vcmp.gt.f32.partialorder %v154, 0.0
  %vm190 = vcmp.gt.f32.partialorder %v168, 0.0
  %vm191 = vcmp.gt.f32.partialorder %v182, 0.0
  %v192 = vmul.f32 %v138, 0.1
  %v193 = vmul.f32 %v152, 0.1
  %v194 = vmul.f32 %v166, 0.1
  %v195 = vmul.f32 %v180, 0.1
  %v196 = vmul.f32 %v140, 0.1
  %v197 = vmul.f32 %v154, 0.1
  %v198 = vmul.f32 %v168, 0.1
  %v199 = vmul.f32 %v182, 0.1
  %v200 = vsel %vm184, %v138, %v192
  %v201 = vsel %vm185, %v152, %v193
  %v202 = vsel %vm186, %v166, %v194
  %v203 = vsel %vm187, %v180, %v195
  %v204 = vsel %vm188, %v140, %v196
  %v205 = vsel %vm189, %v154, %v197
  %v206 = vsel %vm190, %v168, %v198
  %v207 = vsel %vm191, %v182, %v199
  %v208 = vpack.c.bf16 %v201, %v200
  %v209 = vpack.c.bf16 %v203, %v202
  %v210 = vpack.c.bf16 %v205, %v204
  %v211 = vpack.c.bf16 %v207, %v206
  %212 = vst [vmem:[%s3] sm:$0xff] %v208
  %213 = vst [vmem:[%s3 + $0x8] sm:$0xff] %v209
  %214 = vst [vmem:[%s3 + $0x10] sm:$0xff] %v210
  %215 = vst [vmem:[%s3 + $0x18] sm:$0xff] %v211
  // Predicated region
  $region14: #{crf_constituency_forward.9} parent=0 // pred_check
    _
  $region15: #{crf_constituency_forward.9} parent=0 // pred_check_branch
    %217 = sbr.rel (0) target = $region17
  $region16: #{crf_constituency_forward.9} parent=0 // pred_region
    _
  $region17: #{crf_constituency_forward.9} parent=0 // pred_fallthru
    _
  // Predicated region
  $region18: #{crf_constituency_forward.9} parent=0 // pred_check
    _
  $region19: #{crf_constituency_forward.9} parent=0 // pred_check_branch
    %219 = sbr.rel (0) target = $region21
  $region20: #{crf_constituency_forward.9} parent=0 // pred_region
    _
  $region21: #{crf_constituency_forward.9} parent=0 // pred_fallthru
    _

// kernel: crf_constituency_forward.13
$region0: #{crf_constituency_forward.13}
  #allocation0 [shape = 'u32[]', space=smem, size = 0x4, offset = 0x4, fixed_abs, tag = 'smem constant byte address 0x4 - core index']
  #allocation1 [shape = 'u32[72,128]{1,0:T(1,128)}', space=vmem, size = 0x9000, scoped, tag = 'internal scratch']
  %s0 = inlined_call_operand.vmem [shape: bf16[2,7,512], index: 0, kind: input, shape index: {}]
  %s1 = inlined_call_operand.vmem [shape: bf16[2,21,128], index: 1, kind: input, shape index: {}]
  %s2 = inlined_call_operand.vmem [shape: f32[2,7,21], index: 2, kind: output, shape index: {}]
  %s3 = sld [smem:[#allocation0]]
  $region41: #{crf_constituency_forward.13} parent=0
    _
  %s5 = ssub.s32 1, %s3
  %s6 = scalar_select 0, %s5, %s3
  loop: start=0, step=1, limit=4
  $region2: #{crf_constituency_forward.13} parent=0 // loop_pre_header
    _
  $region3: #{crf_constituency_forward.13} parent=0 // loop_header
    %s8 = sphi 0, %s12
    %p9 = scmp.ge.s32.totalorder %s8, 4
    %s15 = sphi 0, %s27
    %s16 = sphi 0, %s23
    %s17 = sphi 0, %s15
    %s18 = sphi 0, %s16
    %s19 = sphi 0, %s17
    %s20 = sphi 0, %s18
    %s32 = sphi 0, %s34
    %s35 = sphi 0, %s32
    %s36 = sphi 0, %s35
    %s52 = sphi 0, %s36
    %s58 = sphi 0, %s60
    %s61 = sphi 0, %s58
    %s62 = sphi 0, %s61
    %s78 = sphi 0, %s62
    %s86 = sphi 0, %s88
    %s89 = sphi 0, %s86
    %s90 = sphi 0, %s89
    %s106 = sphi 0, %s90
  $region4: #{crf_constituency_forward.13} parent=0 // loop_header_branch
    %11 = sbr.rel (%p9) target = $region8
  $region5: #{crf_constituency_forward.13} parent=0 // loop_body
    %s13 = ssub.s32 %s8, 1
    %s14 = ssub.s32 %s8, 2
    %s21 = sadd.s32 1, %s16
    %p22 = scmp.ge.s32.totalorder %s21, 1
    %s23 = scalar_select %p22, 0, %s21
    %s24 = sadd.s32 1, %s15
    %s25 = scalar_select %p22, %s24, %s15
    %p26 = scmp.ge.s32.totalorder %s25, 2
    %s27 = scalar_select %p26, 0, %s25
    %s28 = ssub.s32 %s15, %s27
    %s29 = ssub.s32 %s16, %s23
    %s30 = sor.u32 %s28, %s29
    %p31 = scmp.eq.s32.totalorder %s30, 0
    %s33 = sadd.s32 %s32, 1
    %s34 = scalar_select %p31, %s32, %s33
    %p37 = pneg %p31
    %p38 = scmp.eq.s32.totalorder %s8, 1
    %p39 = por %p37, %p38
    %p40 = scmp.ne.s32.totalorder %s32, %s35
    %p41 = scmp.eq.s32.totalorder %s8, 0
    %p42 = por %p40, %p41
    %p43 = scmp.ne.s32.totalorder %s32, %s35
    %p44 = scmp.eq.s32.totalorder %s13, 1
    %p45 = por %p43, %p44
    %p46 = scmp.ne.s32.totalorder %s35, %s36
    %p47 = scmp.eq.s32.totalorder %s13, 0
    %p48 = por %p46, %p47
    %p49 = scmp.ne.s32.totalorder %s35, %s36
    %p50 = scmp.eq.s32.totalorder %s14, 1
    %p51 = por %p49, %p50
    %p53 = scmp.ne.s32.totalorder %s36, %s52
    %p54 = scmp.eq.s32.totalorder %s14, 0
    %p55 = por %p53, %p54
    %s56 = ssub.s32 %s15, %s27
    %p57 = scmp.eq.s32.totalorder %s56, 0
    %s59 = sadd.s32 %s58, 1
    %s60 = scalar_select %p57, %s58, %s59
    %p63 = pneg %p57
    %p64 = scmp.eq.s32.totalorder %s8, 1
    %p65 = por %p63, %p64
    %p66 = scmp.ne.s32.totalorder %s58, %s61
    %p67 = scmp.eq.s32.totalorder %s8, 0
    %p68 = por %p66, %p67
    %p69 = scmp.ne.s32.totalorder %s58, %s61
    %p70 = scmp.eq.s32.totalorder %s13, 1
    %p71 = por %p69, %p70
    %p72 = scmp.ne.s32.totalorder %s61, %s62
    %p73 = scmp.eq.s32.totalorder %s13, 0
    %p74 = por %p72, %p73
    %p75 = scmp.ne.s32.totalorder %s61, %s62
    %p76 = scmp.eq.s32.totalorder %s14, 1
    %p77 = por %p75, %p76
    %p79 = scmp.ne.s32.totalorder %s62, %s78
    %p80 = scmp.eq.s32.totalorder %s14, 0
    %p81 = por %p79, %p80
    %s82 = ssub.s32 %s15, %s27
    %s83 = ssub.s32 %s16, %s23
    %s84 = sor.u32 %s82, %s83
    %p85 = scmp.eq.s32.totalorder %s84, 0
    %s87 = sadd.s32 %s86, 1
    %s88 = scalar_select %p85, %s86, %s87
    %p91 = pneg %p85
    %p92 = scmp.eq.s32.totalorder %s8, 1
    %p93 = por %p91, %p92
    %p94 = scmp.ne.s32.totalorder %s86, %s89
    %p95 = scmp.eq.s32.totalorder %s8, 0
    %p96 = por %p94, %p95
    %p97 = scmp.ne.s32.totalorder %s86, %s89
    %p98 = scmp.eq.s32.totalorder %s13, 1
    %p99 = por %p97, %p98
    %p100 = scmp.ne.s32.totalorder %s89, %s90
    %p101 = scmp.eq.s32.totalorder %s13, 0
    %p102 = por %p100, %p101
    %p103 = scmp.ne.s32.totalorder %s89, %s90
    %p104 = scmp.eq.s32.totalorder %s14, 1
    %p105 = por %p103, %p104
    %p107 = scmp.ne.s32.totalorder %s90, %s106
    %p108 = scmp.eq.s32.totalorder %s14, 0
    %p109 = por %p107, %p108
    %p110 = scmp.le.s32.totalorder 1, %s8
    %p111 = scmp.lt.s32.totalorder %s8, 3
    %p112 = pnand %p110, %p111
    %p113 = pneg %p112
    // Predicated region
    $region9: #{crf_constituency_forward.13} parent=5 // pred_check
      _
    $region10: #{crf_constituency_forward.13} parent=5 // pred_check_branch
      %115 = sbr.rel (%p112) target = $region12
    $region11: #{crf_constituency_forward.13} parent=5 // pred_region
      %s116 = ssub.s32 %s8, 1
    $region12: #{crf_constituency_forward.13} parent=5 // pred_fallthru
      _
    %p117 = scmp.lt.s32.totalorder %s8, 2
    // Predicated region
    $region13: #{crf_constituency_forward.13} parent=5 // pred_check
      %p118 = pneg %p117
    $region14: #{crf_constituency_forward.13} parent=5 // pred_check_branch
      %120 = sbr.rel (%p118) target = $region16
    $region15: #{crf_constituency_forward.13} parent=5 // pred_region
      // Predicated region
      $region17: #{crf_constituency_forward.13} parent=15 // pred_check
        %p121 = pneg %p42
      $region18: #{crf_constituency_forward.13} parent=15 // pred_check_branch
        %123 = sbr.rel (%p121) target = $region20
      $region19: #{crf_constituency_forward.13} parent=15 // pred_region
        %p124 = scmp.lt.s32.totalorder %s15, 1
        %s125 = scalar_select %p124, %s15, 1
        %p126 = scmp.lt.s32.totalorder %s16, 0
        %s127 = scalar_select %p126, %s16, 0
        %s128 = smul.addr %s127, 4
        %s129 = sadd.s32 2, %s128
        %s130 = smul.addr %s125, 4
        %s131 = sadd.s32 %s129, %s130
        %s132 = smul.addr %s131, 4
        %s133 = scalar_lea.vmem %s0, %s132
      $region20: #{crf_constituency_forward.13} parent=15 // pred_fallthru
        _
      // Predicated region
      $region21: #{crf_constituency_forward.13} parent=15 // pred_check
        %p134 = pneg %p68
      $region22: #{crf_constituency_forward.13} parent=15 // pred_check_branch
        %136 = sbr.rel (%p134) target = $region24
      $region23: #{crf_constituency_forward.13} parent=15 // pred_region
        %p137 = scmp.lt.s32.totalorder %s15, 1
        %s138 = scalar_select %p137, %s15, 1
        %s139 = smul.addr %s138, 3
        %s140 = smul.addr %s139, 4
        %s141 = scalar_lea.vmem %s1, %s140
      $region24: #{crf_constituency_forward.13} parent=15 // pred_fallthru
        _
    $region16: #{crf_constituency_forward.13} parent=5 // pred_fallthru
      _
    %p142 = scmp.le.s32.totalorder 1, %s8
    %p143 = scmp.lt.s32.totalorder %s8, 3
    %p144 = pnand %p142, %p143
    %p145 = pneg %p144
    // Predicated region
    $region25: #{crf_constituency_forward.13} parent=5 // pred_check
      _
    $region26: #{crf_constituency_forward.13} parent=5 // pred_check_branch
      %147 = sbr.rel (%p144) target = $region28
    $region27: #{crf_constituency_forward.13} parent=5 // pred_region
      %s148 = ssub.s32 %s8, 1
      %p149 = scmp.lt.s32.totalorder %s17, 1
      %s150 = scalar_select %p149, %s17, 1
      %p151 = scmp.lt.s32.totalorder %s18, 0
      %s152 = scalar_select %p151, %s18, 0
      %s153 = smul.addr %s152, 4
      %s154 = sadd.s32 2, %s153
      %s155 = smul.addr %s150, 4
      %s156 = sadd.s32 %s154, %s155
      %s157 = smul.addr %s156, 4
      %s158 = scalar_lea.vmem %s0, %s157
      %p159 = pneg %p48
      %p160 = pneg %p45
      %p161 = scmp.lt.s32.totalorder %s17, 1
      %s162 = scalar_select %p161, %s17, 1
      %s163 = smul.addr %s162, 3
      %s164 = smul.addr %s163, 4
      %s165 = scalar_lea.vmem %s1, %s164
      %p166 = pneg %p74
      %p167 = pneg %p71
      %p168 = pneg %p102
      %p169 = pneg %p99
      %p170 = scmp.lt.s32.totalorder %s17, 1
      %s171 = scalar_select %p170, %s17, 1
      %p172 = scmp.lt.s32.totalorder %s18, 0
      %s173 = scalar_select %p172, %s18, 0
      %s174 = sadd.s32 %s173, %s171
      %s175 = smul.addr %s174, 8
      %s176 = scalar_lea.vmem %s2, %s175
      %p177 = scmp.lt.s32.totalorder %s17, 1
      %s178 = scalar_select %p177, %s17, 1
      %p179 = scmp.lt.s32.totalorder %s18, 0
      %s180 = scalar_select %p179, %s18, 0
      %s181 = smul.addr %s180, 4
      %s182 = sadd.s32 2, %s181
      %s183 = smul.addr %s178, 4
      %s184 = sadd.s32 %s182, %s183
      %s185 = smul.addr %s184, 4
      %s186 = scalar_lea.vmem %s0, %s185
      %p187 = scmp.lt.s32.totalorder %s17, 1
      %s188 = scalar_select %p187, %s17, 1
      %s189 = smul.addr %s188, 3
      %s190 = smul.addr %s189, 4
      %s191 = scalar_lea.vmem %s1, %s190
      %p192 = scmp.lt.s32.totalorder %s17, 1
      %s193 = scalar_select %p192, %s17, 1
      %p194 = scmp.lt.s32.totalorder %s18, 0
      %s195 = scalar_select %p194, %s18, 0
      %s196 = sadd.s32 %s195, %s193
      %s197 = smul.addr %s196, 8
      %s198 = scalar_lea.vmem %s2, %s197
      %v200 = vld [vmem:[%s186] sm:$0xf]
      %v201 = vld [vmem:[%s191] sm:$0xf]
      %v202 = vld [vmem:[%s191 + $0x4] sm:$0xf]
      %v203 = vld [vmem:[%s191 + $0x8] sm:$0x7]
      %v207 = vunpack.c.l.b16 %v201
      %v208 = vunpack.c.l.b16 %v202
      %v209 = vunpack.c.l.b16 %v203
      %v210 = vpack.c.b16 %v208, %v207
      %v211 = vpack.c.b16 %v209, %v209
      %214 = vmatpush.bf16.xpose.msra.mxu0 0
      %215 = vmatpush.bf16.xpose.msra.mxu0 0
      %216 = vmatpush.bf16.xpose.msra.mxu0 0
      %217 = vmatpush.bf16.xpose.msra.mxu0 0
      %218 = vmatpush.bf16.xpose.msra.mxu0 0
      %219 = vmatpush.bf16.xpose.msra.mxu0 0
      %220 = vmatpush.bf16.xpose.msra.mxu0 %v211
      %221 = vmatpush.bf16.xpose.msra.mxu0 %v210
      %222 = vmatmul.bf16.gmra.mxu0 %v200
      %v223 = vpop.f32.mrf.mxu0
      %v224 = vadd.f32 0.0, %v223
      %v225 = vpop.f32.mrf.mxu0
      %226 = vdwg.mxu0
      %vm227 = vcmask 169984
      %228 = vst.msk [vmem:[%s198] sm:$0x7f] %vm227, %v224
      %p229 = scmp.lt.s32.totalorder %s17, 1
      %s230 = scalar_select %p229, %s17, 1
      %p231 = scmp.lt.s32.totalorder %s18, 0
      %s232 = scalar_select %p231, %s18, 0
      %s233 = sadd.s32 %s232, %s230
      %s234 = smul.addr %s233, 8
      %s235 = scalar_lea.vmem %s2, %s234
      // Predicated region
      $region29: #{crf_constituency_forward.13} parent=27 // pred_check
        %p236 = pneg %p99
      $region30: #{crf_constituency_forward.13} parent=27 // pred_check_branch
        %238 = sbr.rel (%p236) target = $region32
      $region31: #{crf_constituency_forward.13} parent=27 // pred_region
        _
      $region32: #{crf_constituency_forward.13} parent=27 // pred_fallthru
        _
    $region28: #{crf_constituency_forward.13} parent=5 // pred_fallthru
      _
    %p239 = scmp.le.s32.totalorder 2, %s8
    // Predicated region
    $region33: #{crf_constituency_forward.13} parent=5 // pred_check
      %p240 = pneg %p239
    $region34: #{crf_constituency_forward.13} parent=5 // pred_check_branch
      %242 = sbr.rel (%p240) target = $region36
    $region35: #{crf_constituency_forward.13} parent=5 // pred_region
      %s243 = ssub.s32 %s8, 2
      // Predicated region
      $region37: #{crf_constituency_forward.13} parent=35 // pred_check
        %p244 = pneg %p105
      $region38: #{crf_constituency_forward.13} parent=35 // pred_check_branch
        %246 = sbr.rel (%p244) target = $region40
      $region39: #{crf_constituency_forward.13} parent=35 // pred_region
        %p247 = scmp.lt.s32.totalorder %s19, 1
        %s248 = scalar_select %p247, %s19, 1
        %p249 = scmp.lt.s32.totalorder %s20, 0
        %s250 = scalar_select %p249, %s20, 0
        %s251 = sadd.s32 %s250, %s248
        %s252 = smul.addr %s251, 8
        %s253 = scalar_lea.vmem %s2, %s252
      $region40: #{crf_constituency_forward.13} parent=35 // pred_fallthru
        _
    $region36: #{crf_constituency_forward.13} parent=5 // pred_fallthru
      _
  $region6: #{crf_constituency_forward.13} parent=0 // loop_footer
    %s12 = sadd.s32 1, %s8
  $region7: #{crf_constituency_forward.13} parent=0 // loop_footer_branch
    %7 = sbr.rel target = $region3
  $region8: #{crf_constituency_forward.13} parent=0 // loop_exit
    _

// kernel: crf_constituency_forward.12
$region0: #{crf_constituency_forward.12}
  #allocation0 [shape = 'u32[]', space=smem, size = 0x4, offset = 0x4, fixed_abs, tag = 'smem constant byte address 0x4 - core index']
  #allocation1 [shape = 'u32[72,128]{1,0:T(1,128)}', space=vmem, size = 0x9000, scoped, tag = 'internal scratch']
  %s0 = inlined_call_operand.vmem [shape: bf16[2,7,512], index: 0, kind: input, shape index: {}]
  %s1 = inlined_call_operand.vmem [shape: bf16[2,35,128], index: 1, kind: input, shape index: {}]
  %s2 = inlined_call_operand.vmem [shape: f32[2,7,35], index: 2, kind: output, shape index: {}]
  %s3 = sld [smem:[#allocation0]]
  $region41: #{crf_constituency_forward.12} parent=0
    _
  %s5 = ssub.s32 1, %s3
  %s6 = scalar_select 0, %s5, %s3
  loop: start=0, step=1, limit=4
  $region2: #{crf_constituency_forward.12} parent=0 // loop_pre_header
    _
  $region3: #{crf_constituency_forward.12} parent=0 // loop_header
    %s8 = sphi 0, %s12
    %p9 = scmp.ge.s32.totalorder %s8, 4
    %s15 = sphi 0, %s27
    %s16 = sphi 0, %s23
    %s17 = sphi 0, %s15
    %s18 = sphi 0, %s16
    %s19 = sphi 0, %s17
    %s20 = sphi 0, %s18
    %s32 = sphi 0, %s34
    %s35 = sphi 0, %s32
    %s36 = sphi 0, %s35
    %s52 = sphi 0, %s36
    %s58 = sphi 0, %s60
    %s61 = sphi 0, %s58
    %s62 = sphi 0, %s61
    %s78 = sphi 0, %s62
    %s86 = sphi 0, %s88
    %s89 = sphi 0, %s86
    %s90 = sphi 0, %s89
    %s106 = sphi 0, %s90
  $region4: #{crf_constituency_forward.12} parent=0 // loop_header_branch
    %11 = sbr.rel (%p9) target = $region8
  $region5: #{crf_constituency_forward.12} parent=0 // loop_body
    %s13 = ssub.s32 %s8, 1
    %s14 = ssub.s32 %s8, 2
    %s21 = sadd.s32 1, %s16
    %p22 = scmp.ge.s32.totalorder %s21, 1
    %s23 = scalar_select %p22, 0, %s21
    %s24 = sadd.s32 1, %s15
    %s25 = scalar_select %p22, %s24, %s15
    %p26 = scmp.ge.s32.totalorder %s25, 2
    %s27 = scalar_select %p26, 0, %s25
    %s28 = ssub.s32 %s15, %s27
    %s29 = ssub.s32 %s16, %s23
    %s30 = sor.u32 %s28, %s29
    %p31 = scmp.eq.s32.totalorder %s30, 0
    %s33 = sadd.s32 %s32, 1
    %s34 = scalar_select %p31, %s32, %s33
    %p37 = pneg %p31
    %p38 = scmp.eq.s32.totalorder %s8, 1
    %p39 = por %p37, %p38
    %p40 = scmp.ne.s32.totalorder %s32, %s35
    %p41 = scmp.eq.s32.totalorder %s8, 0
    %p42 = por %p40, %p41
    %p43 = scmp.ne.s32.totalorder %s32, %s35
    %p44 = scmp.eq.s32.totalorder %s13, 1
    %p45 = por %p43, %p44
    %p46 = scmp.ne.s32.totalorder %s35, %s36
    %p47 = scmp.eq.s32.totalorder %s13, 0
    %p48 = por %p46, %p47
    %p49 = scmp.ne.s32.totalorder %s35, %s36
    %p50 = scmp.eq.s32.totalorder %s14, 1
    %p51 = por %p49, %p50
    %p53 = scmp.ne.s32.totalorder %s36, %s52
    %p54 = scmp.eq.s32.totalorder %s14, 0
    %p55 = por %p53, %p54
    %s56 = ssub.s32 %s15, %s27
    %p57 = scmp.eq.s32.totalorder %s56, 0
    %s59 = sadd.s32 %s58, 1
    %s60 = scalar_select %p57, %s58, %s59
    %p63 = pneg %p57
    %p64 = scmp.eq.s32.totalorder %s8, 1
    %p65 = por %p63, %p64
    %p66 = scmp.ne.s32.totalorder %s58, %s61
    %p67 = scmp.eq.s32.totalorder %s8, 0
    %p68 = por %p66, %p67
    %p69 = scmp.ne.s32.totalorder %s58, %s61
    %p70 = scmp.eq.s32.totalorder %s13, 1
    %p71 = por %p69, %p70
    %p72 = scmp.ne.s32.totalorder %s61, %s62
    %p73 = scmp.eq.s32.totalorder %s13, 0
    %p74 = por %p72, %p73
    %p75 = scmp.ne.s32.totalorder %s61, %s62
    %p76 = scmp.eq.s32.totalorder %s14, 1
    %p77 = por %p75, %p76
    %p79 = scmp.ne.s32.totalorder %s62, %s78
    %p80 = scmp.eq.s32.totalorder %s14, 0
    %p81 = por %p79, %p80
    %s82 = ssub.s32 %s15, %s27
    %s83 = ssub.s32 %s16, %s23
    %s84 = sor.u32 %s82, %s83
    %p85 = scmp.eq.s32.totalorder %s84, 0
    %s87 = sadd.s32 %s86, 1
    %s88 = scalar_select %p85, %s86, %s87
    %p91 = pneg %p85
    %p92 = scmp.eq.s32.totalorder %s8, 1
    %p93 = por %p91, %p92
    %p94 = scmp.ne.s32.totalorder %s86, %s89
    %p95 = scmp.eq.s32.totalorder %s8, 0
    %p96 = por %p94, %p95
    %p97 = scmp.ne.s32.totalorder %s86, %s89
    %p98 = scmp.eq.s32.totalorder %s13, 1
    %p99 = por %p97, %p98
    %p100 = scmp.ne.s32.totalorder %s89, %s90
    %p101 = scmp.eq.s32.totalorder %s13, 0
    %p102 = por %p100, %p101
    %p103 = scmp.ne.s32.totalorder %s89, %s90
    %p104 = scmp.eq.s32.totalorder %s14, 1
    %p105 = por %p103, %p104
    %p107 = scmp.ne.s32.totalorder %s90, %s106
    %p108 = scmp.eq.s32.totalorder %s14, 0
    %p109 = por %p107, %p108
    %p110 = scmp.le.s32.totalorder 1, %s8
    %p111 = scmp.lt.s32.totalorder %s8, 3
    %p112 = pnand %p110, %p111
    %p113 = pneg %p112
    // Predicated region
    $region9: #{crf_constituency_forward.12} parent=5 // pred_check
      _
    $region10: #{crf_constituency_forward.12} parent=5 // pred_check_branch
      %115 = sbr.rel (%p112) target = $region12
    $region11: #{crf_constituency_forward.12} parent=5 // pred_region
      %s116 = ssub.s32 %s8, 1
    $region12: #{crf_constituency_forward.12} parent=5 // pred_fallthru
      _
    %p117 = scmp.lt.s32.totalorder %s8, 2
    // Predicated region
    $region13: #{crf_constituency_forward.12} parent=5 // pred_check
      %p118 = pneg %p117
    $region14: #{crf_constituency_forward.12} parent=5 // pred_check_branch
      %120 = sbr.rel (%p118) target = $region16
    $region15: #{crf_constituency_forward.12} parent=5 // pred_region
      // Predicated region
      $region17: #{crf_constituency_forward.12} parent=15 // pred_check
        %p121 = pneg %p42
      $region18: #{crf_constituency_forward.12} parent=15 // pred_check_branch
        %123 = sbr.rel (%p121) target = $region20
      $region19: #{crf_constituency_forward.12} parent=15 // pred_region
        %p124 = scmp.lt.s32.totalorder %s15, 1
        %s125 = scalar_select %p124, %s15, 1
        %p126 = scmp.lt.s32.totalorder %s16, 0
        %s127 = scalar_select %p126, %s16, 0
        %s128 = smul.addr %s127, 4
        %s129 = smul.addr %s125, 4
        %s130 = sadd.s32 %s128, %s129
        %s131 = smul.addr %s130, 4
        %s132 = scalar_lea.vmem %s0, %s131
      $region20: #{crf_constituency_forward.12} parent=15 // pred_fallthru
        _
      // Predicated region
      $region21: #{crf_constituency_forward.12} parent=15 // pred_check
        %p133 = pneg %p68
      $region22: #{crf_constituency_forward.12} parent=15 // pred_check_branch
        %135 = sbr.rel (%p133) target = $region24
      $region23: #{crf_constituency_forward.12} parent=15 // pred_region
        %p136 = scmp.lt.s32.totalorder %s15, 1
        %s137 = scalar_select %p136, %s15, 1
        %s138 = smul.addr %s137, 5
        %s139 = smul.addr %s138, 4
        %s140 = scalar_lea.vmem %s1, %s139
      $region24: #{crf_constituency_forward.12} parent=15 // pred_fallthru
        _
    $region16: #{crf_constituency_forward.12} parent=5 // pred_fallthru
      _
    %p141 = scmp.le.s32.totalorder 1, %s8
    %p142 = scmp.lt.s32.totalorder %s8, 3
    %p143 = pnand %p141, %p142
    %p144 = pneg %p143
    // Predicated region
    $region25: #{crf_constituency_forward.12} parent=5 // pred_check
      _
    $region26: #{crf_constituency_forward.12} parent=5 // pred_check_branch
      %146 = sbr.rel (%p143) target = $region28
    $region27: #{crf_constituency_forward.12} parent=5 // pred_region
      %s147 = ssub.s32 %s8, 1
      %p148 = scmp.lt.s32.totalorder %s17, 1
      %s149 = scalar_select %p148, %s17, 1
      %p150 = scmp.lt.s32.totalorder %s18, 0
      %s151 = scalar_select %p150, %s18, 0
      %s152 = smul.addr %s151, 4
      %s153 = smul.addr %s149, 4
      %s154 = sadd.s32 %s152, %s153
      %s155 = smul.addr %s154, 4
      %s156 = scalar_lea.vmem %s0, %s155
      %p157 = pneg %p48
      %p158 = pneg %p45
      %p159 = scmp.lt.s32.totalorder %s17, 1
      %s160 = scalar_select %p159, %s17, 1
      %s161 = smul.addr %s160, 5
      %s162 = smul.addr %s161, 4
      %s163 = scalar_lea.vmem %s1, %s162
      %p164 = pneg %p74
      %p165 = pneg %p71
      %p166 = pneg %p102
      %p167 = pneg %p99
      %p168 = scmp.lt.s32.totalorder %s17, 1
      %s169 = scalar_select %p168, %s17, 1
      %p170 = scmp.lt.s32.totalorder %s18, 0
      %s171 = scalar_select %p170, %s18, 0
      %s172 = sadd.s32 %s171, %s169
      %s173 = smul.addr %s172, 8
      %s174 = scalar_lea.vmem %s2, %s173
      %p175 = scmp.lt.s32.totalorder %s17, 1
      %s176 = scalar_select %p175, %s17, 1
      %p177 = scmp.lt.s32.totalorder %s18, 0
      %s178 = scalar_select %p177, %s18, 0
      %s179 = smul.addr %s178, 4
      %s180 = smul.addr %s176, 4
      %s181 = sadd.s32 %s179, %s180
      %s182 = smul.addr %s181, 4
      %s183 = scalar_lea.vmem %s0, %s182
      %p184 = scmp.lt.s32.totalorder %s17, 1
      %s185 = scalar_select %p184, %s17, 1
      %s186 = smul.addr %s185, 5
      %s187 = smul.addr %s186, 4
      %s188 = scalar_lea.vmem %s1, %s187
      %p189 = scmp.lt.s32.totalorder %s17, 1
      %s190 = scalar_select %p189, %s17, 1
      %p191 = scmp.lt.s32.totalorder %s18, 0
      %s192 = scalar_select %p191, %s18, 0
      %s193 = sadd.s32 %s192, %s190
      %s194 = smul.addr %s193, 8
      %s195 = scalar_lea.vmem %s2, %s194
      %v197 = vld [vmem:[%s183] sm:$0xf]
      %v198 = vld [vmem:[%s188] sm:$0xf]
      %v199 = vld [vmem:[%s188 + $0x4] sm:$0xf]
      %v200 = vld [vmem:[%s188 + $0x8] sm:$0xf]
      %v201 = vld [vmem:[%s188 + $0xc] sm:$0xf]
      %v202 = vld [vmem:[%s188 + $0x10] sm:$0x3]
      %v208 = vunpack.c.l.b16 %v198
      %v209 = vunpack.c.l.b16 %v199
      %v210 = vunpack.c.l.b16 %v200
      %v211 = vunpack.c.l.b16 %v201
      %v212 = vunpack.c.l.b16 %v202
      %v213 = vpack.c.b16 %v209, %v208
      %v214 = vpack.c.b16 %v211, %v210
      %v215 = vpack.c.b16 %v212, %v212
      %219 = vmatpush.bf16.xpose.msra.mxu0 0
      %220 = vmatpush.bf16.xpose.msra.mxu0 0
      %221 = vmatpush.bf16.xpose.msra.mxu0 0
      %222 = vmatpush.bf16.xpose.msra.mxu0 0
      %223 = vmatpush.bf16.xpose.msra.mxu0 0
      %224 = vmatpush.bf16.xpose.msra.mxu0 %v215
      %225 = vmatpush.bf16.xpose.msra.mxu0 %v214
      %226 = vmatpush.bf16.xpose.msra.mxu0 %v213
      %227 = vmatmul.bf16.gmra.mxu0 %v197
      %v228 = vpop.f32.mrf.mxu0
      %v229 = vadd.f32 0.0, %v228
      %v230 = vpop.f32.mrf.mxu0
      %231 = vdwg.mxu0
      %vm232 = vcmask 284672
      %233 = vst.msk [vmem:[%s195] sm:$0x7f] %vm232, %v229
      %p234 = scmp.lt.s32.totalorder %s17, 1
      %s235 = scalar_select %p234, %s17, 1
      %p236 = scmp.lt.s32.totalorder %s18, 0
      %s237 = scalar_select %p236, %s18, 0
      %s238 = sadd.s32 %s237, %s235
      %s239 = smul.addr %s238, 8
      %s240 = scalar_lea.vmem %s2, %s239
      // Predicated region
      $region29: #{crf_constituency_forward.12} parent=27 // pred_check
        %p241 = pneg %p99
      $region30: #{crf_constituency_forward.12} parent=27 // pred_check_branch
        %243 = sbr.rel (%p241) target = $region32
      $region31: #{crf_constituency_forward.12} parent=27 // pred_region
        _
      $region32: #{crf_constituency_forward.12} parent=27 // pred_fallthru
        _
    $region28: #{crf_constituency_forward.12} parent=5 // pred_fallthru
      _
    %p244 = scmp.le.s32.totalorder 2, %s8
    // Predicated region
    $region33: #{crf_constituency_forward.12} parent=5 // pred_check
      %p245 = pneg %p244
    $region34: #{crf_constituency_forward.12} parent=5 // pred_check_branch
      %247 = sbr.rel (%p245) target = $region36
    $region35: #{crf_constituency_forward.12} parent=5 // pred_region
      %s248 = ssub.s32 %s8, 2
      // Predicated region
      $region37: #{crf_constituency_forward.12} parent=35 // pred_check
        %p249 = pneg %p105
      $region38: #{crf_constituency_forward.12} parent=35 // pred_check_branch
        %251 = sbr.rel (%p249) target = $region40
      $region39: #{crf_constituency_forward.12} parent=35 // pred_region
        %p252 = scmp.lt.s32.totalorder %s19, 1
        %s253 = scalar_select %p252, %s19, 1
        %p254 = scmp.lt.s32.totalorder %s20, 0
        %s255 = scalar_select %p254, %s20, 0
        %s256 = sadd.s32 %s255, %s253
        %s257 = smul.addr %s256, 8
        %s258 = scalar_lea.vmem %s2, %s257
      $region40: #{crf_constituency_forward.12} parent=35 // pred_fallthru
        _
    $region36: #{crf_constituency_forward.12} parent=5 // pred_fallthru
      _
  $region6: #{crf_constituency_forward.12} parent=0 // loop_footer
    %s12 = sadd.s32 1, %s8
  $region7: #{crf_constituency_forward.12} parent=0 // loop_footer_branch
    %7 = sbr.rel target = $region3
  $region8: #{crf_constituency_forward.12} parent=0 // loop_exit
    _

// kernel: crf_constituency_forward.10
$region0: #{crf_constituency_forward.10}
  #allocation0 [shape = 'u32[]', space=smem, size = 0x4, offset = 0x4, fixed_abs, tag = 'smem constant byte address 0x4 - core index']
  #allocation1 [shape = 'u32[72,128]{1,0:T(1,128)}', space=vmem, size = 0x9000, scoped, tag = 'internal scratch']
  %s0 = inlined_call_operand.vmem [shape: bf16[16,512], index: 0, kind: input, shape index: {}]
  %s1 = inlined_call_operand.vmem [shape: bf16[128,640], index: 1, kind: input, shape index: {}]
  %s2 = inlined_call_operand.vmem [shape: bf16[16,640], index: 2, kind: output, shape index: {}]
  %s3 = sld [smem:[#allocation0]]
  $region59: #{crf_constituency_forward.10} parent=0
    _
  %s5 = ssub.s32 1, %s3
  %s6 = scalar_select 0, %s5, %s3
  $region1: #{crf_constituency_forward.10} parent=0
    #allocation2 [shape = 'u8[4096]{0}', space=vmem, size = 0x1000, scoped, tag = 'input window, operand 0, single buffered']
    // Predicated region
    $region2: #{crf_constituency_forward.10} parent=1 // pred_check
      _
    $region3: #{crf_constituency_forward.10} parent=1 // pred_check_branch
      %8 = sbr.rel (0) target = $region5
    $region4: #{crf_constituency_forward.10} parent=1 // pred_region
      %s9 = scalar_lea.vmem %s0, 4
      // Predicated region
      $region6: #{crf_constituency_forward.10} parent=4 // pred_check
        _
      $region7: #{crf_constituency_forward.10} parent=4 // pred_check_branch
        %11 = sbr.rel (0) target = $region9
      $region8: #{crf_constituency_forward.10} parent=4 // pred_region
        // Predicated region
        $region10: #{crf_constituency_forward.10} parent=8 // pred_check
          _
        $region11: #{crf_constituency_forward.10} parent=8 // pred_check_branch
          %13 = sbr.rel target = $region13
        $region12: #{crf_constituency_forward.10} parent=8 // pred_region
          // Predicated region
          $region25: #{crf_constituency_forward.10} parent=12 // pred_check
            _
          $region26: #{crf_constituency_forward.10} parent=12 // pred_check_branch
            %31 = sbr.rel (0) target = $region28
          $region27: #{crf_constituency_forward.10} parent=12 // pred_region
            loop: start=0, step=1, limit=1
            $region29: #{crf_constituency_forward.10} parent=27 // loop_pre_header
              _
            $region30: #{crf_constituency_forward.10} parent=27 // loop_header
              %s33 = sphi 0, %s37
              %p34 = scmp.ge.s32.totalorder %s33, 1
              %s38 = sphi %s9, %s9
              %s39 = sphi [#allocation2], [#allocation2]
            $region31: #{crf_constituency_forward.10} parent=27 // loop_header_branch
              %36 = sbr.rel (%p34) target = $region35
            $region32: #{crf_constituency_forward.10} parent=27 // loop_body
              _
            $region33: #{crf_constituency_forward.10} parent=27 // loop_footer
              %s37 = sadd.s32 1, %s33
            $region34: #{crf_constituency_forward.10} parent=27 // loop_footer_branch
              %32 = sbr.rel target = $region30
            $region35: #{crf_constituency_forward.10} parent=27 // loop_exit
              _
            %s41 = ssub.s32 16, 1
            loop: start=0, step=1, limit=1
            $region36: #{crf_constituency_forward.10} parent=27 // loop_pre_header
              _
            $region37: #{crf_constituency_forward.10} parent=27 // loop_header
              %s43 = sphi 0, %s47
              %p44 = scmp.ge.s32.totalorder %s43, 1
              %s48 = sphi %s9, %s9
              %s49 = sphi [#allocation2], [#allocation2]
            $region38: #{crf_constituency_forward.10} parent=27 // loop_header_branch
              %46 = sbr.rel (%p44) target = $region42
            $region39: #{crf_constituency_forward.10} parent=27 // loop_body
              %v50 = vld [vmem:[%s48] sm:%s41]
              %51 = vst [vmem:[%s49] sm:%s41] %v50
              %v52 = vld [vmem:[%s48 + $0x10] sm:%s41]
              %53 = vst [vmem:[%s49 + $0x4] sm:%s41] %v52
            $region40: #{crf_constituency_forward.10} parent=27 // loop_footer
              %s47 = sadd.s32 1, %s43
            $region41: #{crf_constituency_forward.10} parent=27 // loop_footer_branch
              %42 = sbr.rel target = $region37
            $region42: #{crf_constituency_forward.10} parent=27 // loop_exit
              _
          $region28: #{crf_constituency_forward.10} parent=12 // pred_fallthru
            _
        $region13: #{crf_constituency_forward.10} parent=8 // pred_fallthru
          _
        // Predicated region
        $region14: #{crf_constituency_forward.10} parent=8 // pred_check
          _
        $region15: #{crf_constituency_forward.10} parent=8 // pred_check_branch
          %15 = sbr.rel (0) target = $region17
        $region16: #{crf_constituency_forward.10} parent=8 // pred_region
          %s17 = ssub.s32 16, 1
          loop: start=0, step=1, limit=1
          $region18: #{crf_constituency_forward.10} parent=16 // loop_pre_header
            _
          $region19: #{crf_constituency_forward.10} parent=16 // loop_header
            %s19 = sphi 0, %s23
            %p20 = scmp.ge.s32.totalorder %s19, 1
            %s24 = sphi %s9, %s9
            %s25 = sphi [#allocation2], [#allocation2]
          $region20: #{crf_constituency_forward.10} parent=16 // loop_header_branch
            %22 = sbr.rel (%p20) target = $region24
          $region21: #{crf_constituency_forward.10} parent=16 // loop_body
            %v26 = vld [vmem:[%s24] sm:%s17]
            %27 = vst [vmem:[%s25] sm:%s17] %v26
            %v28 = vld [vmem:[%s24 + $0x10] sm:%s17]
            %29 = vst [vmem:[%s25 + $0x4] sm:%s17] %v28
          $region22: #{crf_constituency_forward.10} parent=16 // loop_footer
            %s23 = sadd.s32 1, %s19
          $region23: #{crf_constituency_forward.10} parent=16 // loop_footer_branch
            %18 = sbr.rel target = $region19
          $region24: #{crf_constituency_forward.10} parent=16 // loop_exit
            _
        $region17: #{crf_constituency_forward.10} parent=8 // pred_fallthru
          _
      $region9: #{crf_constituency_forward.10} parent=4 // pred_fallthru
        _
      %54 = vnop
    $region5: #{crf_constituency_forward.10} parent=1 // pred_fallthru
      _
    // Predicated region
    $region43: #{crf_constituency_forward.10} parent=1 // pred_check
      _
    $region44: #{crf_constituency_forward.10} parent=1 // pred_check_branch
      %56 = sbr.rel (0) target = $region46
    $region45: #{crf_constituency_forward.10} parent=1 // pred_region
      _
    $region46: #{crf_constituency_forward.10} parent=1 // pred_fallthru
      _
    // Predicated region
    $region47: #{crf_constituency_forward.10} parent=1 // pred_check
      _
    $region48: #{crf_constituency_forward.10} parent=1 // pred_check_branch
      %58 = sbr.rel (0) target = $region50
    $region49: #{crf_constituency_forward.10} parent=1 // pred_region
      _
    $region50: #{crf_constituency_forward.10} parent=1 // pred_fallthru
      _
    %v59 = vld [vmem:[#allocation2] sm:$0xf]
    %v60 = vld [vmem:[#allocation2 + $0x4] sm:$0xf]
    %v61 = vld [vmem:[%s1] sm:$0xff]
    %v62 = vld [vmem:[%s1 + $0x8] sm:$0xff]
    %v63 = vld [vmem:[%s1 + $0x10] sm:$0xf]
    %v64 = vld [vmem:[%s1 + $0x14] sm:$0xff]
    %v65 = vld [vmem:[%s1 + $0x1c] sm:$0xff]
    %v66 = vld [vmem:[%s1 + $0x24] sm:$0xf]
    %v67 = vld [vmem:[%s1 + $0x28] sm:$0xff]
    %v68 = vld [vmem:[%s1 + $0x30] sm:$0xff]
    %v69 = vld [vmem:[%s1 + $0x38] sm:$0xf]
    %v70 = vld [vmem:[%s1 + $0x3c] sm:$0xff]
    %v71 = vld [vmem:[%s1 + $0x44] sm:$0xff]
    %v72 = vld [vmem:[%s1 + $0x4c] sm:$0xf]
    %v73 = vld [vmem:[%s1 + $0x50] sm:$0xff]
    %v74 = vld [vmem:[%s1 + $0x58] sm:$0xff]
    %v75 = vld [vmem:[%s1 + $0x60] sm:$0xf]
    %v76 = vld [vmem:[%s1 + $0x64] sm:$0xff]
    %v77 = vld [vmem:[%s1 + $0x6c] sm:$0xff]
    %v78 = vld [vmem:[%s1 + $0x74] sm:$0xf]
    %v79 = vld [vmem:[%s1 + $0x78] sm:$0xff]
    %v80 = vld [vmem:[%s1 + $0x80] sm:$0xff]
    %v81 = vld [vmem:[%s1 + $0x88] sm:$0xf]
    %v82 = vld [vmem:[%s1 + $0x8c] sm:$0xff]
    %v83 = vld [vmem:[%s1 + $0x94] sm:$0xff]
    %v84 = vld [vmem:[%s1 + $0x9c] sm:$0xf]
    %v85 = vld [vmem:[%s1 + $0xa0] sm:$0xff]
    %v86 = vld [vmem:[%s1 + $0xa8] sm:$0xff]
    %v87 = vld [vmem:[%s1 + $0xb0] sm:$0xf]
    %v88 = vld [vmem:[%s1 + $0xb4] sm:$0xff]
    %v89 = vld [vmem:[%s1 + $0xbc] sm:$0xff]
    %v90 = vld [vmem:[%s1 + $0xc4] sm:$0xf]
    %v91 = vld [vmem:[%s1 + $0xc8] sm:$0xff]
    %v92 = vld [vmem:[%s1 + $0xd0] sm:$0xff]
    %v93 = vld [vmem:[%s1 + $0xd8] sm:$0xf]
    %v94 = vld [vmem:[%s1 + $0xdc] sm:$0xff]
    %v95 = vld [vmem:[%s1 + $0xe4] sm:$0xff]
    %v96 = vld [vmem:[%s1 + $0xec] sm:$0xf]
    %v97 = vld [vmem:[%s1 + $0xf0] sm:$0xff]
    %v98 = vld [vmem:[%s1 + $0xf8] sm:$0xff]
    %v99 = vld [vmem:[%s1 + $0x100] sm:$0xf]
    %v100 = vld [vmem:[%s1 + $0x104] sm:$0xff]
    %v101 = vld [vmem:[%s1 + $0x10c] sm:$0xff]
    %v102 = vld [vmem:[%s1 + $0x114] sm:$0xf]
    %v103 = vld [vmem:[%s1 + $0x118] sm:$0xff]
    %v104 = vld [vmem:[%s1 + $0x120] sm:$0xff]
    %v105 = vld [vmem:[%s1 + $0x128] sm:$0xf]
    %v106 = vld [vmem:[%s1 + $0x12c] sm:$0xff]
    %v107 = vld [vmem:[%s1 + $0x134] sm:$0xff]
    %v108 = vld [vmem:[%s1 + $0x13c] sm:$0xf]
    %v111 = vunpack.c.l.b16 %v59
    %v112 = vunpack.c.l.b16 %v60
    %v113 = vpack.c.b16 %v112, %v111
    %v163 = vunpack.c.l.b16 %v61
    %v164 = vunpack.c.h.b16 %v61
    %v165 = vunpack.c.l.b16 %v62
    %v166 = vunpack.c.h.b16 %v62
    %v167 = vunpack.c.l.b16 %v63
    %v168 = vunpack.c.l.b16 %v64
    %v169 = vunpack.c.h.b16 %v64
    %v170 = vunpack.c.l.b16 %v65
    %v171 = vunpack.c.h.b16 %v65
    %v172 = vunpack.c.l.b16 %v66
    %v173 = vunpack.c.l.b16 %v67
    %v174 = vunpack.c.h.b16 %v67
    %v175 = vunpack.c.l.b16 %v68
    %v176 = vunpack.c.h.b16 %v68
    %v177 = vunpack.c.l.b16 %v69
    %v178 = vunpack.c.l.b16 %v70
    %v179 = vunpack.c.h.b16 %v70
    %v180 = vunpack.c.l.b16 %v71
    %v181 = vunpack.c.h.b16 %v71
    %v182 = vunpack.c.l.b16 %v72
    %v183 = vunpack.c.l.b16 %v73
    %v184 = vunpack.c.h.b16 %v73
    %v185 = vunpack.c.l.b16 %v74
    %v186 = vunpack.c.h.b16 %v74
    %v187 = vunpack.c.l.b16 %v75
    %v188 = vunpack.c.l.b16 %v76
    %v189 = vunpack.c.h.b16 %v76
    %v190 = vunpack.c.l.b16 %v77
    %v191 = vunpack.c.h.b16 %v77
    %v192 = vunpack.c.l.b16 %v78
    %v193 = vunpack.c.l.b16 %v79
    %v194 = vunpack.c.h.b16 %v79
    %v195 = vunpack.c.l.b16 %v80
    %v196 = vunpack.c.h.b16 %v80
    %v197 = vunpack.c.l.b16 %v81
    %v198 = vunpack.c.l.b16 %v82
    %v199 = vunpack.c.h.b16 %v82
    %v200 = vunpack.c.l.b16 %v83
    %v201 = vunpack.c.h.b16 %v83
    %v202 = vunpack.c.l.b16 %v84
    %v203 = vunpack.c.l.b16 %v85
    %v204 = vunpack.c.h.b16 %v85
    %v205 = vunpack.c.l.b16 %v86
    %v206 = vunpack.c.h.b16 %v86
    %v207 = vunpack.c.l.b16 %v87
    %v208 = vunpack.c.l.b16 %v88
    %v209 = vunpack.c.h.b16 %v88
    %v210 = vunpack.c.l.b16 %v89
    %v211 = vunpack.c.h.b16 %v89
    %v212 = vunpack.c.l.b16 %v90
    %v213 = vunpack.c.l.b16 %v91
    %v214 = vunpack.c.h.b16 %v91
    %v215 = vunpack.c.l.b16 %v92
    %v216 = vunpack.c.h.b16 %v92
    %v217 = vunpack.c.l.b16 %v93
    %v218 = vunpack.c.l.b16 %v94
    %v219 = vunpack.c.h.b16 %v94
    %v220 = vunpack.c.l.b16 %v95
    %v221 = vunpack.c.h.b16 %v95
    %v222 = vunpack.c.l.b16 %v96
    %v223 = vunpack.c.l.b16 %v97
    %v224 = vunpack.c.h.b16 %v97
    %v225 = vunpack.c.l.b16 %v98
    %v226 = vunpack.c.h.b16 %v98
    %v227 = vunpack.c.l.b16 %v99
    %v228 = vunpack.c.l.b16 %v100
    %v229 = vunpack.c.h.b16 %v100
    %v230 = vunpack.c.l.b16 %v101
    %v231 = vunpack.c.h.b16 %v101
    %v232 = vunpack.c.l.b16 %v102
    %v233 = vunpack.c.l.b16 %v103
    %v234 = vunpack.c.h.b16 %v103
    %v235 = vunpack.c.l.b16 %v104
    %v236 = vunpack.c.h.b16 %v104
    %v237 = vunpack.c.l.b16 %v105
    %v238 = vunpack.c.l.b16 %v106
    %v239 = vunpack.c.h.b16 %v106
    %v240 = vunpack.c.l.b16 %v107
    %v241 = vunpack.c.h.b16 %v107
    %v242 = vunpack.c.l.b16 %v108
    %v243 = vpack.c.b16 %v168, %v163
    %v244 = vpack.c.b16 %v169, %v164
    %v245 = vpack.c.b16 %v170, %v165
    %v246 = vpack.c.b16 %v171, %v166
    %v247 = vpack.c.b16 %v172, %v167
    %v248 = vpack.c.b16 %v178, %v173
    %v249 = vpack.c.b16 %v179, %v174
    %v250 = vpack.c.b16 %v180, %v175
    %v251 = vpack.c.b16 %v181, %v176
    %v252 = vpack.c.b16 %v182, %v177
    %v253 = vpack.c.b16 %v188, %v183
    %v254 = vpack.c.b16 %v189, %v184
    %v255 = vpack.c.b16 %v190, %v185
    %v256 = vpack.c.b16 %v191, %v186
    %v257 = vpack.c.b16 %v192, %v187
    %v258 = vpack.c.b16 %v198, %v193
    %v259 = vpack.c.b16 %v199, %v194
    %v260 = vpack.c.b16 %v200, %v195
    %v261 = vpack.c.b16 %v201, %v196
    %v262 = vpack.c.b16 %v202, %v197
    %v263 = vpack.c.b16 %v208, %v203
    %v264 = vpack.c.b16 %v209, %v204
    %v265 = vpack.c.b16 %v210, %v205
    %v266 = vpack.c.b16 %v211, %v206
    %v267 = vpack.c.b16 %v212, %v207
    %v268 = vpack.c.b16 %v218, %v213
    %v269 = vpack.c.b16 %v219, %v214
    %v270 = vpack.c.b16 %v220, %v215
    %v271 = vpack.c.b16 %v221, %v216
    %v272 = vpack.c.b16 %v222, %v217
    %v273 = vpack.c.b16 %v228, %v223
    %v274 = vpack.c.b16 %v229, %v224
    %v275 = vpack.c.b16 %v230, %v225
    %v276 = vpack.c.b16 %v231, %v226
    %v277 = vpack.c.b16 %v232, %v227
    %v278 = vpack.c.b16 %v238, %v233
    %v279 = vpack.c.b16 %v239, %v234
    %v280 = vpack.c.b16 %v240, %v235
    %v281 = vpack.c.b16 %v241, %v236
    %v282 = vpack.c.b16 %v242, %v237
    %323 = vmatpush.bf16.msra.mxu0 %v278
    %324 = vmatpush.bf16.msra.mxu0 %v273
    %325 = vmatpush.bf16.msra.mxu0 %v268
    %326 = vmatpush.bf16.msra.mxu0 %v263
    %327 = vmatpush.bf16.msra.mxu0 %v258
    %328 = vmatpush.bf16.msra.mxu0 %v253
    %329 = vmatpush.bf16.msra.mxu0 %v248
    %330 = vmatpush.bf16.msra.mxu0 %v243
    %331 = vmatmul.bf16.gmra.mxu0 %v113
    %v332 = vpop.f32.mrf.mxu0
    %v333 = vadd.f32 0.0, %v332
    %v334 = vpop.f32.mrf.mxu0
    %v335 = vadd.f32 0.0, %v334
    %336 = vdwg.mxu0
    %337 = vmatpush.bf16.msra.mxu0 %v279
    %338 = vmatpush.bf16.msra.mxu0 %v274
    %339 = vmatpush.bf16.msra.mxu0 %v269
    %340 = vmatpush.bf16.msra.mxu0 %v264
    %341 = vmatpush.bf16.msra.mxu0 %v259
    %342 = vmatpush.bf16.msra.mxu0 %v254
    %343 = vmatpush.bf16.msra.mxu0 %v249
    %344 = vmatpush.bf16.msra.mxu0 %v244
    %345 = vmatmul.bf16.gmra.mxu0 %v113
    %v346 = vpop.f32.mrf.mxu0
    %v347 = vadd.f32 0.0, %v346
    %v348 = vpop.f32.mrf.mxu0
    %v349 = vadd.f32 0.0, %v348
    %350 = vdwg.mxu0
    %351 = vmatpush.bf16.msra.mxu0 %v280
    %352 = vmatpush.bf16.msra.mxu0 %v275
    %353 = vmatpush.bf16.msra.mxu0 %v270
    %354 = vmatpush.bf16.msra.mxu0 %v265
    %355 = vmatpush.bf16.msra.mxu0 %v260
    %356 = vmatpush.bf16.msra.mxu0 %v255
    %357 = vmatpush.bf16.msra.mxu0 %v250
    %358 = vmatpush.bf16.msra.mxu0 %v245
    %359 = vmatmul.bf16.gmra.mxu0 %v113
    %v360 = vpop.f32.mrf.mxu0
    %v361 = vadd.f32 0.0, %v360
    %v362 = vpop.f32.mrf.mxu0
    %v363 = vadd.f32 0.0, %v362
    %364 = vdwg.mxu0
    %365 = vmatpush.bf16.msra.mxu0 %v281
    %366 = vmatpush.bf16.msra.mxu0 %v276
    %367 = vmatpush.bf16.msra.mxu0 %v271
    %368 = vmatpush.bf16.msra.mxu0 %v266
    %369 = vmatpush.bf16.msra.mxu0 %v261
    %370 = vmatpush.bf16.msra.mxu0 %v256
    %371 = vmatpush.bf16.msra.mxu0 %v251
    %372 = vmatpush.bf16.msra.mxu0 %v246
    %373 = vmatmul.bf16.gmra.mxu0 %v113
    %v374 = vpop.f32.mrf.mxu0
    %v375 = vadd.f32 0.0, %v374
    %v376 = vpop.f32.mrf.mxu0
    %v377 = vadd.f32 0.0, %v376
    %378 = vdwg.mxu0
    %379 = vmatpush.bf16.msra.mxu0 %v282
    %380 = vmatpush.bf16.msra.mxu0 %v277
    %381 = vmatpush.bf16.msra.mxu0 %v272
    %382 = vmatpush.bf16.msra.mxu0 %v267
    %383 = vmatpush.bf16.msra.mxu0 %v262
    %384 = vmatpush.bf16.msra.mxu0 %v257
    %385 = vmatpush.bf16.msra.mxu0 %v252
    %386 = vmatpush.bf16.msra.mxu0 %v247
    %387 = vmatmul.bf16.gmra.mxu0 %v113
    %v388 = vpop.f32.mrf.mxu0
    %v389 = vadd.f32 0.0, %v388
    %v390 = vpop.f32.mrf.mxu0
    %v391 = vadd.f32 0.0, %v390
    %392 = vdwg.mxu0
    %v393 = vpack.c.bf16 %v347, %v333
    %v394 = vpack.c.bf16 %v375, %v361
    %v395 = vpack.c.bf16 %v389, %v389
    %v396 = vpack.c.bf16 %v349, %v335
    %v397 = vpack.c.bf16 %v377, %v363
    %v398 = vpack.c.bf16 %v391, %v391
    %399 = vst [vmem:[%s2] sm:$0xff] %v393
    %400 = vst [vmem:[%s2 + $0x8] sm:$0xff] %v394
    %401 = vst [vmem:[%s2 + $0x10] sm:$0xf] %v395
    %402 = vst [vmem:[%s2 + $0x14] sm:$0xff] %v396
    %403 = vst [vmem:[%s2 + $0x1c] sm:$0xff] %v397
    %404 = vst [vmem:[%s2 + $0x24] sm:$0xf] %v398
    // Predicated region
    $region51: #{crf_constituency_forward.10} parent=1 // pred_check
      _
    $region52: #{crf_constituency_forward.10} parent=1 // pred_check_branch
      %406 = sbr.rel (0) target = $region54
    $region53: #{crf_constituency_forward.10} parent=1 // pred_region
      _
    $region54: #{crf_constituency_forward.10} parent=1 // pred_fallthru
      _
    // Predicated region
    $region55: #{crf_constituency_forward.10} parent=1 // pred_check
      _
    $region56: #{crf_constituency_forward.10} parent=1 // pred_check_branch
      %408 = sbr.rel (0) target = $region58
    $region57: #{crf_constituency_forward.10} parent=1 // pred_region
      _
    $region58: #{crf_constituency_forward.10} parent=1 // pred_fallthru
      _

</llo_original>
